<compile_context>
chip_gen: v7x
topology: tpu7x:2x2x1
jax: 0.10.0
libtpu: 0.0.40
codegen_flags: <defaults>
</compile_context>

<pallas_src>
import math
import jax
import jax.numpy as jnp
from jax import lax
from jax.experimental import pallas as pl
from jax.experimental.pallas import tpu as pltpu


def _round_up(x, m):
    return ((x + m - 1) // m) * m


def _rnn_fused_kernel(x_ref, wih_ref, whh_ref, bias_ref, who_ref, bho_ref,
                      os_ref, hs_ref, xz_ref):
    """Whole-sequence RNN forward in a single invocation.

    x_ref    : (T, BP, IP)  time-major, zero-padded input          (VMEM)
    wih_ref  : (IP, HP)     W_ih^T (padded)
    whh_ref  : (HP, HP)     W_hh^T (padded)
    bias_ref : (1, HP)      b_ih + b_hh (padded)
    who_ref  : (HP, OP)     W_ho^T (padded)
    bho_ref  : (1, OP)      b_ho (padded)
    os_ref   : (T, BP, OP)  time-major outputs
    hs_ref   : (T, BP, HP)  time-major hidden states
    xz_ref   : (T, BP, HP)  f32 scratch holding the hoisted input projection
    """
    T, BP, IP = x_ref.shape
    HP = whh_ref.shape[0]

    # ---- hoisted input projection: ONE (T*BP, IP) @ (IP, HP) MXU matmul ----
    x2 = x_ref[...].reshape(T * BP, IP)                      # layout-preserving reshape
    xz = jnp.dot(x2, wih_ref[...], preferred_element_type=jnp.float32)
    xz = xz + bias_ref[...]                                  # fused (b_ih + b_hh)
    xz_ref[...] = xz.reshape(T, BP, HP)                      # park in VMEM scratch

    # Loop-invariant operands hoisted once (not re-loaded per step).
    whh = whh_ref[...]
    who = who_ref[...]
    bho = bho_ref[...]

    # ---- t = 0: previous state is all zeros -> skip the HxH matmul entirely ----
    h = jnp.tanh(xz_ref[0])
    hs_ref[0] = h.astype(hs_ref.dtype)
    os_ref[0] = (jnp.dot(h, who, preferred_element_type=jnp.float32)
                 + bho).astype(os_ref.dtype)

    # ---- serial recurrence with interleaved readout ----
    # Per step: one (BP,HP)@(HP,HP) matmul + tanh on the critical path; the
    # (BP,HP)@(HP,OP) readout matmul is free filler in the MXU slack.
    def step(t, h):
        h = jnp.tanh(xz_ref[t] + jnp.dot(h, whh, preferred_element_type=jnp.float32))
        hs_ref[t] = h.astype(hs_ref.dtype)                   # contiguous full-slab store
        os_ref[t] = (jnp.dot(h, who, preferred_element_type=jnp.float32)
                     + bho).astype(os_ref.dtype)
        return h

    unroll = True if T <= 16 else 8                          # bounded unroll caps vreg pressure
    lax.fori_loop(1, T, step, h, unroll=unroll)


def rnn_forward(x, w_ih, w_hh, b_ih, b_hh, w_ho, b_ho):
    """x: (B, T, I) batch_first.  Weights stored pre-transposed as (in, out).

    Returns (os: (B, T, O), hs: (B, T, H)), matching RNNBase.forward.
    """
    B, T, I = x.shape
    H = w_hh.shape[0]
    O = w_ho.shape[1]
    dtype = x.dtype

    BP = _round_up(B, 8)      # sublane-dense batch (f32: 8 sublanes)
    IP = _round_up(I, 128)    # lane-dense dims
    HP = _round_up(H, 128)
    OP = _round_up(O, 128)

    # Time-major + zero-pad (single fused XLA copy). Zero weight rows/cols and zero
    # bias lanes keep padded H lanes exactly 0 for real rows; padded batch rows carry
    # tanh(bias) garbage but never mix with real rows and are sliced off below.
    x_p = jnp.pad(jnp.transpose(x, (1, 0, 2)),
                  ((0, 0), (0, BP - B), (0, IP - I)))
    w_ih_p = jnp.pad(w_ih, ((0, IP - I), (0, HP - H)))
    w_hh_p = jnp.pad(w_hh, ((0, HP - H), (0, HP - H)))
    w_ho_p = jnp.pad(w_ho, ((0, HP - H), (0, OP - O)))
    bias_p = jnp.pad((b_ih + b_hh).reshape(1, H), ((0, 0), (0, HP - H)))
    b_ho_p = jnp.pad(b_ho.reshape(1, O), ((0, 0), (0, OP - O)))

    # Explicit VMEM budget (all buffers are single-buffered: no grid -> no pipelining).
    resident_bytes = 4 * (T * BP * IP          # x
                          + IP * HP + HP * HP  # W_ih^T, W_hh^T
                          + HP * OP + HP + OP  # W_ho^T, biases
                          + T * BP * OP        # os
                          + 2 * T * BP * HP)   # hs + xz scratch
    vmem_limit = int(min(max(2 * resident_bytes + (2 << 20), 32 << 20), 100 << 20))

    vmem_spec = pl.BlockSpec(memory_space=pltpu.MemorySpace.VMEM)

    os_p, hs_p = pl.pallas_call(
        _rnn_fused_kernel,
        out_shape=(
            jax.ShapeDtypeStruct((T, BP, OP), dtype),
            jax.ShapeDtypeStruct((T, BP, HP), dtype),
        ),
        in_specs=[vmem_spec] * 6,          # whole arrays resident in VMEM, no double-buffering
        out_specs=(vmem_spec, vmem_spec),
        scratch_shapes=[pltpu.VMEM((T, BP, HP), jnp.float32)],   # f32 xz scratch
        compiler_params=pltpu.CompilerParams(vmem_limit_bytes=vmem_limit),
    )(x_p, w_ih_p, w_hh_p, bias_p, w_ho_p, b_ho_p)

    # Back to batch_first and un-pad. At toy sizes this is negligible; at scale hand
    # time-major results to the consumer instead (extra HBM round-trip, worst on v5e).
    os = jnp.transpose(os_p, (1, 0, 2))[:B, :, :O]
    hs = jnp.transpose(hs_p, (1, 0, 2))[:B, :, :H]
    return os, hs


def _reference(x, w_ih, w_hh, b_ih, b_hh, w_ho, b_ho):
    """Pure-JAX reference mirroring the PyTorch per-timestep loop."""
    B, T, I = x.shape
    H = w_hh.shape[0]
    h = jnp.zeros((B, H), x.dtype)

    def step(h, xt):
        h_new = jnp.tanh(xt @ w_ih + b_ih + h @ w_hh + b_hh)
        o = h_new @ w_ho + b_ho
        return h_new, (o, h_new)

    _, (os, hs) = jax.lax.scan(step, h, jnp.transpose(x, (1, 0, 2)))
    return jnp.transpose(os, (1, 0, 2)), jnp.transpose(hs, (1, 0, 2))


if __name__ == "__main__":
    B, T, I, H, O = 2, 8, 16, 32, 8
    key = jax.random.PRNGKey(0)
    kx, k1, k2, k3, k4, k5, k6 = jax.random.split(key, 7)

    bound = 1.0 / math.sqrt(H)   # PyTorch RNNCell-style uniform init
    x = jax.random.normal(kx, (B, T, I), jnp.float32)
    w_ih = jax.random.uniform(k1, (I, H), jnp.float32, -bound, bound)  # stored as W_ih^T
    w_hh = jax.random.uniform(k2, (H, H), jnp.float32, -bound, bound)  # stored as W_hh^T
    b_ih = jax.random.uniform(k3, (H,), jnp.float32, -bound, bound)
    b_hh = jax.random.uniform(k4, (H,), jnp.float32, -bound, bound)
    w_ho = jax.random.uniform(k5, (H, O), jnp.float32, -bound, bound)  # stored as W_ho^T
    b_ho = jax.random.uniform(k6, (O,), jnp.float32, -bound, bound)

    os_out, hs_out = rnn_forward(x, w_ih, w_hh, b_ih, b_hh, w_ho, b_ho)
    jax.block_until_ready((os_out, hs_out))

    os_exp, hs_exp = _reference(x, w_ih, w_hh, b_ih, b_hh, w_ho, b_ho)
    assert os_out.shape == (B, T, O) and hs_out.shape == (B, T, H)
    assert jnp.allclose(os_out, os_exp, atol=2e-5, rtol=2e-5)
    assert jnp.allclose(hs_out, hs_exp, atol=2e-5, rtol=2e-5)

    # TODO(synk): RNNBase is cell-agnostic (rnn_cell is injected); a vanilla tanh RNN
    # cell with a linear readout is the concrete cell implemented here. The
    # trainable_h0 path is not implemented (h0=None -> zeros).
    print("KERNEL_OK")
</pallas_src>

<mosaic_0001>
module attributes {stable_mosaic.version = 11 : i64} {
  func.func @_rnn_fused_kernel(%arg0: memref<8x8x128xf32, #tpu.memory_space<vmem>>, %arg1: memref<128x128xf32, #tpu.memory_space<vmem>>, %arg2: memref<128x128xf32, #tpu.memory_space<vmem>>, %arg3: memref<1x128xf32, #tpu.memory_space<vmem>>, %arg4: memref<128x128xf32, #tpu.memory_space<vmem>>, %arg5: memref<1x128xf32, #tpu.memory_space<vmem>>, %arg6: memref<8x8x128xf32, #tpu.memory_space<vmem>>, %arg7: memref<8x8x128xf32, #tpu.memory_space<vmem>>, %arg8: memref<8x8x128xf32, #tpu.memory_space<vmem>>) attributes {dimension_semantics = [], scalar_prefetch = 0 : i64, scratch_operands = 1 : i64, tpu.core_type = #tpu.core_type<tc>} {
    %c0 = arith.constant 0 : index
    %c0_0 = arith.constant 0 : index
    %c0_1 = arith.constant 0 : index
    %0 = vector.load %arg0[%c0, %c0_0, %c0_1] : memref<8x8x128xf32, #tpu.memory_space<vmem>>, vector<8x8x128xf32>
    %1 = vector.shape_cast %0 : vector<8x8x128xf32> to vector<64x128xf32>
    %c0_2 = arith.constant 0 : index
    %c0_3 = arith.constant 0 : index
    %2 = vector.load %arg1[%c0_2, %c0_3] : memref<128x128xf32, #tpu.memory_space<vmem>>, vector<128x128xf32>
    %cst = arith.constant dense<0.000000e+00> : vector<64x128xf32>
    %3 = tpu.matmul %1, %2, %cst {dimension_numbers = #tpu.dot_dimension_numbers<[1], [0], [0], [1], [0, 0, 1, 1], [], []>} : vector<64x128xf32>, vector<128x128xf32>, vector<64x128xf32> -> vector<64x128xf32>
    %c0_4 = arith.constant 0 : index
    %c0_5 = arith.constant 0 : index
    %4 = vector.load %arg3[%c0_4, %c0_5] : memref<1x128xf32, #tpu.memory_space<vmem>>, vector<1x128xf32>
    %5 = vector.broadcast %4 : vector<1x128xf32> to vector<64x128xf32>
    %6 = arith.addf %3, %5 : vector<64x128xf32>
    %7 = vector.shape_cast %6 : vector<64x128xf32> to vector<8x8x128xf32>
    %c0_6 = arith.constant 0 : index
    %c0_7 = arith.constant 0 : index
    %c0_8 = arith.constant 0 : index
    %8 = vector.load %arg8[%c0_6, %c0_7, %c0_8] : memref<8x8x128xf32, #tpu.memory_space<vmem>>, vector<8x8x128xf32>
    tpu.vector_store %arg8[%c0_6, %c0_7, %c0_8], %7 {strides = array<i32>} : memref<8x8x128xf32, #tpu.memory_space<vmem>>, vector<8x8x128xf32>,
    %c0_9 = arith.constant 0 : index
    %c0_10 = arith.constant 0 : index
    %9 = vector.load %arg2[%c0_9, %c0_10] : memref<128x128xf32, #tpu.memory_space<vmem>>, vector<128x128xf32>
    %c0_11 = arith.constant 0 : index
    %c0_12 = arith.constant 0 : index
    %10 = vector.load %arg4[%c0_11, %c0_12] : memref<128x128xf32, #tpu.memory_space<vmem>>, vector<128x128xf32>
    %c0_13 = arith.constant 0 : index
    %c0_14 = arith.constant 0 : index
    %11 = vector.load %arg5[%c0_13, %c0_14] : memref<1x128xf32, #tpu.memory_space<vmem>>, vector<1x128xf32>
    %c0_15 = arith.constant 0 : index
    %c0_16 = arith.constant 0 : index
    %c0_17 = arith.constant 0 : index
    %12 = vector.load %arg8[%c0_15, %c0_16, %c0_17] : memref<8x8x128xf32, #tpu.memory_space<vmem>>, vector<1x8x128xf32>
    %13 = vector.shape_cast %12 : vector<1x8x128xf32> to vector<8x128xf32>
    %14 = math.tanh %13 : vector<8x128xf32>
    %c0_18 = arith.constant 0 : index
    %c0_19 = arith.constant 0 : index
    %c0_20 = arith.constant 0 : index
    %15 = vector.load %arg7[%c0_18, %c0_19, %c0_20] : memref<8x8x128xf32, #tpu.memory_space<vmem>>, vector<1x8x128xf32>
    %16 = vector.shape_cast %15 : vector<1x8x128xf32> to vector<8x128xf32>
    %17 = vector.shape_cast %14 : vector<8x128xf32> to vector<1x8x128xf32>
    tpu.vector_store %arg7[%c0_18, %c0_19, %c0_20], %17 {strides = array<i32>} : memref<8x8x128xf32, #tpu.memory_space<vmem>>, vector<1x8x128xf32>,
    %cst_21 = arith.constant dense<0.000000e+00> : vector<8x128xf32>
    %18 = tpu.matmul %14, %10, %cst_21 {dimension_numbers = #tpu.dot_dimension_numbers<[1], [0], [0], [1], [0, 0, 1, 1], [], []>} : vector<8x128xf32>, vector<128x128xf32>, vector<8x128xf32> -> vector<8x128xf32>
    %19 = vector.broadcast %11 : vector<1x128xf32> to vector<8x128xf32>
    %20 = arith.addf %18, %19 : vector<8x128xf32>
    %c0_22 = arith.constant 0 : index
    %c0_23 = arith.constant 0 : index
    %c0_24 = arith.constant 0 : index
    %21 = vector.load %arg6[%c0_22, %c0_23, %c0_24] : memref<8x8x128xf32, #tpu.memory_space<vmem>>, vector<1x8x128xf32>
    %22 = vector.shape_cast %21 : vector<1x8x128xf32> to vector<8x128xf32>
    %23 = vector.shape_cast %20 : vector<8x128xf32> to vector<1x8x128xf32>
    tpu.vector_store %arg6[%c0_22, %c0_23, %c0_24], %23 {strides = array<i32>} : memref<8x8x128xf32, #tpu.memory_space<vmem>>, vector<1x8x128xf32>,
    %c1_i32 = arith.constant 1 : i32
    %24 = arith.index_cast %c1_i32 : i32 to index
    %c0_25 = arith.constant 0 : index
    %c0_26 = arith.constant 0 : index
    %25 = vector.load %arg8[%24, %c0_25, %c0_26] : memref<8x8x128xf32, #tpu.memory_space<vmem>>, vector<1x8x128xf32>
    %26 = vector.shape_cast %25 : vector<1x8x128xf32> to vector<8x128xf32>
    %cst_27 = arith.constant dense<0.000000e+00> : vector<8x128xf32>
    %27 = tpu.matmul %14, %9, %cst_27 {dimension_numbers = #tpu.dot_dimension_numbers<[1], [0], [0], [1], [0, 0, 1, 1], [], []>} : vector<8x128xf32>, vector<128x128xf32>, vector<8x128xf32> -> vector<8x128xf32>
    %28 = arith.addf %26, %27 : vector<8x128xf32>
    %29 = math.tanh %28 : vector<8x128xf32>
    %30 = arith.index_cast %c1_i32 : i32 to index
    %c0_28 = arith.constant 0 : index
    %c0_29 = arith.constant 0 : index
    %31 = vector.load %arg7[%30, %c0_28, %c0_29] : memref<8x8x128xf32, #tpu.memory_space<vmem>>, vector<1x8x128xf32>
    %32 = vector.shape_cast %31 : vector<1x8x128xf32> to vector<8x128xf32>
    %33 = vector.shape_cast %29 : vector<8x128xf32> to vector<1x8x128xf32>
    tpu.vector_store %arg7[%30, %c0_28, %c0_29], %33 {strides = array<i32>} : memref<8x8x128xf32, #tpu.memory_space<vmem>>, vector<1x8x128xf32>,
    %cst_30 = arith.constant dense<0.000000e+00> : vector<8x128xf32>
    %34 = tpu.matmul %29, %10, %cst_30 {dimension_numbers = #tpu.dot_dimension_numbers<[1], [0], [0], [1], [0, 0, 1, 1], [], []>} : vector<8x128xf32>, vector<128x128xf32>, vector<8x128xf32> -> vector<8x128xf32>
    %35 = vector.broadcast %11 : vector<1x128xf32> to vector<8x128xf32>
    %36 = arith.addf %34, %35 : vector<8x128xf32>
    %37 = arith.index_cast %c1_i32 : i32 to index
    %c0_31 = arith.constant 0 : index
    %c0_32 = arith.constant 0 : index
    %38 = vector.load %arg6[%37, %c0_31, %c0_32] : memref<8x8x128xf32, #tpu.memory_space<vmem>>, vector<1x8x128xf32>
    %39 = vector.shape_cast %38 : vector<1x8x128xf32> to vector<8x128xf32>
    %40 = vector.shape_cast %36 : vector<8x128xf32> to vector<1x8x128xf32>
    tpu.vector_store %arg6[%37, %c0_31, %c0_32], %40 {strides = array<i32>} : memref<8x8x128xf32, #tpu.memory_space<vmem>>, vector<1x8x128xf32>,
    %c2_i32 = arith.constant 2 : i32
    %41 = arith.index_cast %c2_i32 : i32 to index
    %c0_33 = arith.constant 0 : index
    %c0_34 = arith.constant 0 : index
    %42 = vector.load %arg8[%41, %c0_33, %c0_34] : memref<8x8x128xf32, #tpu.memory_space<vmem>>, vector<1x8x128xf32>
    %43 = vector.shape_cast %42 : vector<1x8x128xf32> to vector<8x128xf32>
    %cst_35 = arith.constant dense<0.000000e+00> : vector<8x128xf32>
    %44 = tpu.matmul %29, %9, %cst_35 {dimension_numbers = #tpu.dot_dimension_numbers<[1], [0], [0], [1], [0, 0, 1, 1], [], []>} : vector<8x128xf32>, vector<128x128xf32>, vector<8x128xf32> -> vector<8x128xf32>
    %45 = arith.addf %43, %44 : vector<8x128xf32>
    %46 = math.tanh %45 : vector<8x128xf32>
    %47 = arith.index_cast %c2_i32 : i32 to index
    %c0_36 = arith.constant 0 : index
    %c0_37 = arith.constant 0 : index
    %48 = vector.load %arg7[%47, %c0_36, %c0_37] : memref<8x8x128xf32, #tpu.memory_space<vmem>>, vector<1x8x128xf32>
    %49 = vector.shape_cast %48 : vector<1x8x128xf32> to vector<8x128xf32>
    %50 = vector.shape_cast %46 : vector<8x128xf32> to vector<1x8x128xf32>
    tpu.vector_store %arg7[%47, %c0_36, %c0_37], %50 {strides = array<i32>} : memref<8x8x128xf32, #tpu.memory_space<vmem>>, vector<1x8x128xf32>,
    %cst_38 = arith.constant dense<0.000000e+00> : vector<8x128xf32>
    %51 = tpu.matmul %46, %10, %cst_38 {dimension_numbers = #tpu.dot_dimension_numbers<[1], [0], [0], [1], [0, 0, 1, 1], [], []>} : vector<8x128xf32>, vector<128x128xf32>, vector<8x128xf32> -> vector<8x128xf32>
    %52 = vector.broadcast %11 : vector<1x128xf32> to vector<8x128xf32>
    %53 = arith.addf %51, %52 : vector<8x128xf32>
    %54 = arith.index_cast %c2_i32 : i32 to index
    %c0_39 = arith.constant 0 : index
    %c0_40 = arith.constant 0 : index
    %55 = vector.load %arg6[%54, %c0_39, %c0_40] : memref<8x8x128xf32, #tpu.memory_space<vmem>>, vector<1x8x128xf32>
    %56 = vector.shape_cast %55 : vector<1x8x128xf32> to vector<8x128xf32>
    %57 = vector.shape_cast %53 : vector<8x128xf32> to vector<1x8x128xf32>
    tpu.vector_store %arg6[%54, %c0_39, %c0_40], %57 {strides = array<i32>} : memref<8x8x128xf32, #tpu.memory_space<vmem>>, vector<1x8x128xf32>,
    %c3_i32 = arith.constant 3 : i32
    %58 = arith.index_cast %c3_i32 : i32 to index
    %c0_41 = arith.constant 0 : index
    %c0_42 = arith.constant 0 : index
    %59 = vector.load %arg8[%58, %c0_41, %c0_42] : memref<8x8x128xf32, #tpu.memory_space<vmem>>, vector<1x8x128xf32>
    %60 = vector.shape_cast %59 : vector<1x8x128xf32> to vector<8x128xf32>
    %cst_43 = arith.constant dense<0.000000e+00> : vector<8x128xf32>
    %61 = tpu.matmul %46, %9, %cst_43 {dimension_numbers = #tpu.dot_dimension_numbers<[1], [0], [0], [1], [0, 0, 1, 1], [], []>} : vector<8x128xf32>, vector<128x128xf32>, vector<8x128xf32> -> vector<8x128xf32>
    %62 = arith.addf %60, %61 : vector<8x128xf32>
    %63 = math.tanh %62 : vector<8x128xf32>
    %64 = arith.index_cast %c3_i32 : i32 to index
    %c0_44 = arith.constant 0 : index
    %c0_45 = arith.constant 0 : index
    %65 = vector.load %arg7[%64, %c0_44, %c0_45] : memref<8x8x128xf32, #tpu.memory_space<vmem>>, vector<1x8x128xf32>
    %66 = vector.shape_cast %65 : vector<1x8x128xf32> to vector<8x128xf32>
    %67 = vector.shape_cast %63 : vector<8x128xf32> to vector<1x8x128xf32>
    tpu.vector_store %arg7[%64, %c0_44, %c0_45], %67 {strides = array<i32>} : memref<8x8x128xf32, #tpu.memory_space<vmem>>, vector<1x8x128xf32>,
    %cst_46 = arith.constant dense<0.000000e+00> : vector<8x128xf32>
    %68 = tpu.matmul %63, %10, %cst_46 {dimension_numbers = #tpu.dot_dimension_numbers<[1], [0], [0], [1], [0, 0, 1, 1], [], []>} : vector<8x128xf32>, vector<128x128xf32>, vector<8x128xf32> -> vector<8x128xf32>
    %69 = vector.broadcast %11 : vector<1x128xf32> to vector<8x128xf32>
    %70 = arith.addf %68, %69 : vector<8x128xf32>
    %71 = arith.index_cast %c3_i32 : i32 to index
    %c0_47 = arith.constant 0 : index
    %c0_48 = arith.constant 0 : index
    %72 = vector.load %arg6[%71, %c0_47, %c0_48] : memref<8x8x128xf32, #tpu.memory_space<vmem>>, vector<1x8x128xf32>
    %73 = vector.shape_cast %72 : vector<1x8x128xf32> to vector<8x128xf32>
    %74 = vector.shape_cast %70 : vector<8x128xf32> to vector<1x8x128xf32>
    tpu.vector_store %arg6[%71, %c0_47, %c0_48], %74 {strides = array<i32>} : memref<8x8x128xf32, #tpu.memory_space<vmem>>, vector<1x8x128xf32>,
    %c4_i32 = arith.constant 4 : i32
    %75 = arith.index_cast %c4_i32 : i32 to index
    %c0_49 = arith.constant 0 : index
    %c0_50 = arith.constant 0 : index
    %76 = vector.load %arg8[%75, %c0_49, %c0_50] : memref<8x8x128xf32, #tpu.memory_space<vmem>>, vector<1x8x128xf32>
    %77 = vector.shape_cast %76 : vector<1x8x128xf32> to vector<8x128xf32>
    %cst_51 = arith.constant dense<0.000000e+00> : vector<8x128xf32>
    %78 = tpu.matmul %63, %9, %cst_51 {dimension_numbers = #tpu.dot_dimension_numbers<[1], [0], [0], [1], [0, 0, 1, 1], [], []>} : vector<8x128xf32>, vector<128x128xf32>, vector<8x128xf32> -> vector<8x128xf32>
    %79 = arith.addf %77, %78 : vector<8x128xf32>
    %80 = math.tanh %79 : vector<8x128xf32>
    %81 = arith.index_cast %c4_i32 : i32 to index
    %c0_52 = arith.constant 0 : index
    %c0_53 = arith.constant 0 : index
    %82 = vector.load %arg7[%81, %c0_52, %c0_53] : memref<8x8x128xf32, #tpu.memory_space<vmem>>, vector<1x8x128xf32>
    %83 = vector.shape_cast %82 : vector<1x8x128xf32> to vector<8x128xf32>
    %84 = vector.shape_cast %80 : vector<8x128xf32> to vector<1x8x128xf32>
    tpu.vector_store %arg7[%81, %c0_52, %c0_53], %84 {strides = array<i32>} : memref<8x8x128xf32, #tpu.memory_space<vmem>>, vector<1x8x128xf32>,
    %cst_54 = arith.constant dense<0.000000e+00> : vector<8x128xf32>
    %85 = tpu.matmul %80, %10, %cst_54 {dimension_numbers = #tpu.dot_dimension_numbers<[1], [0], [0], [1], [0, 0, 1, 1], [], []>} : vector<8x128xf32>, vector<128x128xf32>, vector<8x128xf32> -> vector<8x128xf32>
    %86 = vector.broadcast %11 : vector<1x128xf32> to vector<8x128xf32>
    %87 = arith.addf %85, %86 : vector<8x128xf32>
    %88 = arith.index_cast %c4_i32 : i32 to index
    %c0_55 = arith.constant 0 : index
    %c0_56 = arith.constant 0 : index
    %89 = vector.load %arg6[%88, %c0_55, %c0_56] : memref<8x8x128xf32, #tpu.memory_space<vmem>>, vector<1x8x128xf32>
    %90 = vector.shape_cast %89 : vector<1x8x128xf32> to vector<8x128xf32>
    %91 = vector.shape_cast %87 : vector<8x128xf32> to vector<1x8x128xf32>
    tpu.vector_store %arg6[%88, %c0_55, %c0_56], %91 {strides = array<i32>} : memref<8x8x128xf32, #tpu.memory_space<vmem>>, vector<1x8x128xf32>,
    %c5_i32 = arith.constant 5 : i32
    %92 = arith.index_cast %c5_i32 : i32 to index
    %c0_57 = arith.constant 0 : index
    %c0_58 = arith.constant 0 : index
    %93 = vector.load %arg8[%92, %c0_57, %c0_58] : memref<8x8x128xf32, #tpu.memory_space<vmem>>, vector<1x8x128xf32>
    %94 = vector.shape_cast %93 : vector<1x8x128xf32> to vector<8x128xf32>
    %cst_59 = arith.constant dense<0.000000e+00> : vector<8x128xf32>
    %95 = tpu.matmul %80, %9, %cst_59 {dimension_numbers = #tpu.dot_dimension_numbers<[1], [0], [0], [1], [0, 0, 1, 1], [], []>} : vector<8x128xf32>, vector<128x128xf32>, vector<8x128xf32> -> vector<8x128xf32>
    %96 = arith.addf %94, %95 : vector<8x128xf32>
    %97 = math.tanh %96 : vector<8x128xf32>
    %98 = arith.index_cast %c5_i32 : i32 to index
    %c0_60 = arith.constant 0 : index
    %c0_61 = arith.constant 0 : index
    %99 = vector.load %arg7[%98, %c0_60, %c0_61] : memref<8x8x128xf32, #tpu.memory_space<vmem>>, vector<1x8x128xf32>
    %100 = vector.shape_cast %99 : vector<1x8x128xf32> to vector<8x128xf32>
    %101 = vector.shape_cast %97 : vector<8x128xf32> to vector<1x8x128xf32>
    tpu.vector_store %arg7[%98, %c0_60, %c0_61], %101 {strides = array<i32>} : memref<8x8x128xf32, #tpu.memory_space<vmem>>, vector<1x8x128xf32>,
    %cst_62 = arith.constant dense<0.000000e+00> : vector<8x128xf32>
    %102 = tpu.matmul %97, %10, %cst_62 {dimension_numbers = #tpu.dot_dimension_numbers<[1], [0], [0], [1], [0, 0, 1, 1], [], []>} : vector<8x128xf32>, vector<128x128xf32>, vector<8x128xf32> -> vector<8x128xf32>
    %103 = vector.broadcast %11 : vector<1x128xf32> to vector<8x128xf32>
    %104 = arith.addf %102, %103 : vector<8x128xf32>
    %105 = arith.index_cast %c5_i32 : i32 to index
    %c0_63 = arith.constant 0 : index
    %c0_64 = arith.constant 0 : index
    %106 = vector.load %arg6[%105, %c0_63, %c0_64] : memref<8x8x128xf32, #tpu.memory_space<vmem>>, vector<1x8x128xf32>
    %107 = vector.shape_cast %106 : vector<1x8x128xf32> to vector<8x128xf32>
    %108 = vector.shape_cast %104 : vector<8x128xf32> to vector<1x8x128xf32>
    tpu.vector_store %arg6[%105, %c0_63, %c0_64], %108 {strides = array<i32>} : memref<8x8x128xf32, #tpu.memory_space<vmem>>, vector<1x8x128xf32>,
    %c6_i32 = arith.constant 6 : i32
    %109 = arith.index_cast %c6_i32 : i32 to index
    %c0_65 = arith.constant 0 : index
    %c0_66 = arith.constant 0 : index
    %110 = vector.load %arg8[%109, %c0_65, %c0_66] : memref<8x8x128xf32, #tpu.memory_space<vmem>>, vector<1x8x128xf32>
    %111 = vector.shape_cast %110 : vector<1x8x128xf32> to vector<8x128xf32>
    %cst_67 = arith.constant dense<0.000000e+00> : vector<8x128xf32>
    %112 = tpu.matmul %97, %9, %cst_67 {dimension_numbers = #tpu.dot_dimension_numbers<[1], [0], [0], [1], [0, 0, 1, 1], [], []>} : vector<8x128xf32>, vector<128x128xf32>, vector<8x128xf32> -> vector<8x128xf32>
    %113 = arith.addf %111, %112 : vector<8x128xf32>
    %114 = math.tanh %113 : vector<8x128xf32>
    %115 = arith.index_cast %c6_i32 : i32 to index
    %c0_68 = arith.constant 0 : index
    %c0_69 = arith.constant 0 : index
    %116 = vector.load %arg7[%115, %c0_68, %c0_69] : memref<8x8x128xf32, #tpu.memory_space<vmem>>, vector<1x8x128xf32>
    %117 = vector.shape_cast %116 : vector<1x8x128xf32> to vector<8x128xf32>
    %118 = vector.shape_cast %114 : vector<8x128xf32> to vector<1x8x128xf32>
    tpu.vector_store %arg7[%115, %c0_68, %c0_69], %118 {strides = array<i32>} : memref<8x8x128xf32, #tpu.memory_space<vmem>>, vector<1x8x128xf32>,
    %cst_70 = arith.constant dense<0.000000e+00> : vector<8x128xf32>
    %119 = tpu.matmul %114, %10, %cst_70 {dimension_numbers = #tpu.dot_dimension_numbers<[1], [0], [0], [1], [0, 0, 1, 1], [], []>} : vector<8x128xf32>, vector<128x128xf32>, vector<8x128xf32> -> vector<8x128xf32>
    %120 = vector.broadcast %11 : vector<1x128xf32> to vector<8x128xf32>
    %121 = arith.addf %119, %120 : vector<8x128xf32>
    %122 = arith.index_cast %c6_i32 : i32 to index
    %c0_71 = arith.constant 0 : index
    %c0_72 = arith.constant 0 : index
    %123 = vector.load %arg6[%122, %c0_71, %c0_72] : memref<8x8x128xf32, #tpu.memory_space<vmem>>, vector<1x8x128xf32>
    %124 = vector.shape_cast %123 : vector<1x8x128xf32> to vector<8x128xf32>
    %125 = vector.shape_cast %121 : vector<8x128xf32> to vector<1x8x128xf32>
    tpu.vector_store %arg6[%122, %c0_71, %c0_72], %125 {strides = array<i32>} : memref<8x8x128xf32, #tpu.memory_space<vmem>>, vector<1x8x128xf32>,
    %c7_i32 = arith.constant 7 : i32
    %126 = arith.index_cast %c7_i32 : i32 to index
    %c0_73 = arith.constant 0 : index
    %c0_74 = arith.constant 0 : index
    %127 = vector.load %arg8[%126, %c0_73, %c0_74] : memref<8x8x128xf32, #tpu.memory_space<vmem>>, vector<1x8x128xf32>
    %128 = vector.shape_cast %127 : vector<1x8x128xf32> to vector<8x128xf32>
    %cst_75 = arith.constant dense<0.000000e+00> : vector<8x128xf32>
    %129 = tpu.matmul %114, %9, %cst_75 {dimension_numbers = #tpu.dot_dimension_numbers<[1], [0], [0], [1], [0, 0, 1, 1], [], []>} : vector<8x128xf32>, vector<128x128xf32>, vector<8x128xf32> -> vector<8x128xf32>
    %130 = arith.addf %128, %129 : vector<8x128xf32>
    %131 = math.tanh %130 : vector<8x128xf32>
    %132 = arith.index_cast %c7_i32 : i32 to index
    %c0_76 = arith.constant 0 : index
    %c0_77 = arith.constant 0 : index
    %133 = vector.load %arg7[%132, %c0_76, %c0_77] : memref<8x8x128xf32, #tpu.memory_space<vmem>>, vector<1x8x128xf32>
    %134 = vector.shape_cast %133 : vector<1x8x128xf32> to vector<8x128xf32>
    %135 = vector.shape_cast %131 : vector<8x128xf32> to vector<1x8x128xf32>
    tpu.vector_store %arg7[%132, %c0_76, %c0_77], %135 {strides = array<i32>} : memref<8x8x128xf32, #tpu.memory_space<vmem>>, vector<1x8x128xf32>,
    %cst_78 = arith.constant dense<0.000000e+00> : vector<8x128xf32>
    %136 = tpu.matmul %131, %10, %cst_78 {dimension_numbers = #tpu.dot_dimension_numbers<[1], [0], [0], [1], [0, 0, 1, 1], [], []>} : vector<8x128xf32>, vector<128x128xf32>, vector<8x128xf32> -> vector<8x128xf32>
    %137 = vector.broadcast %11 : vector<1x128xf32> to vector<8x128xf32>
    %138 = arith.addf %136, %137 : vector<8x128xf32>
    %139 = arith.index_cast %c7_i32 : i32 to index
    %c0_79 = arith.constant 0 : index
    %c0_80 = arith.constant 0 : index
    %140 = vector.load %arg6[%139, %c0_79, %c0_80] : memref<8x8x128xf32, #tpu.memory_space<vmem>>, vector<1x8x128xf32>
    %141 = vector.shape_cast %140 : vector<1x8x128xf32> to vector<8x128xf32>
    %142 = vector.shape_cast %138 : vector<8x128xf32> to vector<1x8x128xf32>
    tpu.vector_store %arg6[%139, %c0_79, %c0_80], %142 {strides = array<i32>} : memref<8x8x128xf32, #tpu.memory_space<vmem>>, vector<1x8x128xf32>,
    %c7_i32_81 = arith.constant 7 : i32
    return
  }
}

</mosaic_0001>

<llo_original>
// kernel: tpu_custom_call.1
$region0: #{tpu_custom_call.1}
  #allocation0 [shape = 'u32[]', space=smem, size = 0x4, offset = 0x4, fixed_abs, tag = 'smem constant byte address 0x4 - core index']
  #allocation1 [shape = 'u32[144,128]{1,0:T(1,128)}', space=vmem, size = 0x12000, scoped, tag = 'internal scratch']
  #allocation2 [shape = 'f32[8,8,128]{2,1,0:T(8,128)}', space=vmem, size = 0x8000, scoped, tag = 'scratch operand']
  %s0 = inlined_call_operand.hbm [shape: f32[8,8,128], index: 0, kind: input, shape index: {}]
  %s1 = inlined_call_operand.hbm [shape: f32[128,128], index: 1, kind: input, shape index: {}]
  %s2 = inlined_call_operand.hbm [shape: f32[128,128], index: 2, kind: input, shape index: {}]
  %s3 = inlined_call_operand.vmem [shape: f32[1,128], index: 3, kind: input, shape index: {}]
  %s4 = inlined_call_operand.hbm [shape: f32[128,128], index: 4, kind: input, shape index: {}]
  %s5 = inlined_call_operand.vmem [shape: f32[1,128], index: 5, kind: input, shape index: {}]
  %s6 = inlined_call_operand.hbm [shape: f32[8,8,128], index: 6, kind: output, shape index: {0}]
  %s7 = inlined_call_operand.hbm [shape: f32[8,8,128], index: 7, kind: output, shape index: {1}]
  %8 = xla_tuple %s6, %s7
  %s9 = sld [smem:[#allocation0]]
  $region58: #{tpu_custom_call.1} parent=0
    _
  %s11 = ssub.s32 1, %s9
  %s12 = scalar_select 0, %s11, %s9
  $region1: #{tpu_custom_call.1} parent=0
    #allocation3 [shape = 'u8[32768]{0}', space=vmem, size = 0x8000, scoped, tag = 'input window, operand 0, single buffered']
    #allocation4 [shape = 's32[1]{0}', space=sflag, size = 0x4, scoped, tag = 'scoped memory for tpu_custom_call.1']
    #allocation5 [shape = 's32[1]{0}', space=sflag, size = 0x4, scoped, tag = 'scoped memory for tpu_custom_call.1']
    #allocation6 [shape = 'u8[65536]{0}', space=vmem, size = 0x10000, scoped, tag = 'input window, operand 1, single buffered']
    #allocation7 [shape = 's32[1]{0}', space=sflag, size = 0x4, scoped, tag = 'scoped memory for tpu_custom_call.1']
    #allocation8 [shape = 'u8[65536]{0}', space=vmem, size = 0x10000, scoped, tag = 'input window, operand 2, single buffered']
    #allocation9 [shape = 'u8[65536]{0}', space=vmem, size = 0x10000, scoped, tag = 'input window, operand 4, single buffered']
    #allocation10 [shape = 's32[1]{0}', space=sflag, size = 0x4, scoped, tag = 'scoped memory for tpu_custom_call.1']
    #allocation11 [shape = 'u8[32768]{0}', space=vmem, size = 0x8000, scoped, tag = 'output window, operand 0, single buffered']
    #allocation12 [shape = 'u8[32768]{0}', space=vmem, size = 0x8000, scoped, tag = 'output window, operand 1, single buffered']
    #allocation13 [shape = 's32[1]{0}', space=sflag, size = 0x4, scoped, tag = 'scoped memory for tpu_custom_call.1']
    %13 = vsyncpa [#allocation4], 0
    %14 = vsyncpa [#allocation7], 0
    %15 = vsyncpa [#allocation10], 0
    %16 = vsyncpa [#allocation5], 0
    %17 = vsyncpa [#allocation13], 0
    // Predicated region
    $region2: #{tpu_custom_call.1} parent=1 // pred_check
      _
    $region3: #{tpu_custom_call.1} parent=1 // pred_check_branch
      %19 = sbr.rel (0) target = $region5
    $region4: #{tpu_custom_call.1} parent=1 // pred_region
      %s21 = ssub.s32 1024, 1024
      %22 = vsyncadd [#allocation4], %s21
      %s23 = sshll.u32 [#allocation3], 4
      %s24 = int_to_ptr.vmem [resolvable:$true] %s23
      %29 = dma.hbm_to_vmem [thread:$0]  %s0, 1024, %s24, [#allocation4], 128, 128, 8
    $region5: #{tpu_custom_call.1} parent=1 // pred_fallthru
      _
    // Predicated region
    $region6: #{tpu_custom_call.1} parent=1 // pred_check
      _
    $region7: #{tpu_custom_call.1} parent=1 // pred_check_branch
      %31 = sbr.rel (0) target = $region9
    $region8: #{tpu_custom_call.1} parent=1 // pred_region
      %s33 = ssub.s32 2048, 2048
      %34 = vsyncadd [#allocation7], %s33
      %s35 = sshll.u32 [#allocation6], 4
      %s36 = int_to_ptr.vmem [resolvable:$true] %s35
      %41 = dma.hbm_to_vmem [thread:$0]  %s1, 2048, %s36, [#allocation7], 128, 128, 8
    $region9: #{tpu_custom_call.1} parent=1 // pred_fallthru
      _
    // Predicated region
    $region10: #{tpu_custom_call.1} parent=1 // pred_check
      _
    $region11: #{tpu_custom_call.1} parent=1 // pred_check_branch
      %43 = sbr.rel (0) target = $region13
    $region12: #{tpu_custom_call.1} parent=1 // pred_region
      %s45 = ssub.s32 2048, 2048
      %46 = vsyncadd [#allocation7], %s45
      %s47 = sshll.u32 [#allocation8], 4
      %s48 = int_to_ptr.vmem [resolvable:$true] %s47
      %53 = dma.hbm_to_vmem [thread:$0]  %s2, 2048, %s48, [#allocation7], 128, 128, 8
    $region13: #{tpu_custom_call.1} parent=1 // pred_fallthru
      _
    // Predicated region
    $region14: #{tpu_custom_call.1} parent=1 // pred_check
      _
    $region15: #{tpu_custom_call.1} parent=1 // pred_check_branch
      %55 = sbr.rel (0) target = $region17
    $region16: #{tpu_custom_call.1} parent=1 // pred_region
      _
    $region17: #{tpu_custom_call.1} parent=1 // pred_fallthru
      _
    // Predicated region
    $region18: #{tpu_custom_call.1} parent=1 // pred_check
      _
    $region19: #{tpu_custom_call.1} parent=1 // pred_check_branch
      %57 = sbr.rel (0) target = $region21
    $region20: #{tpu_custom_call.1} parent=1 // pred_region
      %s59 = ssub.s32 2048, 2048
      %60 = vsyncadd [#allocation10], %s59
      %s61 = sshll.u32 [#allocation9], 4
      %s62 = int_to_ptr.vmem [resolvable:$true] %s61
      %67 = dma.hbm_to_vmem [thread:$0]  %s4, 2048, %s62, [#allocation10], 128, 128, 8
    $region21: #{tpu_custom_call.1} parent=1 // pred_fallthru
      _
    // Predicated region
    $region22: #{tpu_custom_call.1} parent=1 // pred_check
      _
    $region23: #{tpu_custom_call.1} parent=1 // pred_check_branch
      %69 = sbr.rel (0) target = $region25
    $region24: #{tpu_custom_call.1} parent=1 // pred_region
      _
    $region25: #{tpu_custom_call.1} parent=1 // pred_fallthru
      _
    // Predicated region
    $region26: #{tpu_custom_call.1} parent=1 // pred_check
      _
    $region27: #{tpu_custom_call.1} parent=1 // pred_check_branch
      %71 = sbr.rel (0) target = $region29
    $region28: #{tpu_custom_call.1} parent=1 // pred_region
      %72 = dma.done [#allocation4], 1024
    $region29: #{tpu_custom_call.1} parent=1 // pred_fallthru
      _
    // Predicated region
    $region30: #{tpu_custom_call.1} parent=1 // pred_check
      _
    $region31: #{tpu_custom_call.1} parent=1 // pred_check_branch
      %74 = sbr.rel (0) target = $region33
    $region32: #{tpu_custom_call.1} parent=1 // pred_region
      %75 = dma.done [#allocation7], 2048
    $region33: #{tpu_custom_call.1} parent=1 // pred_fallthru
      _
    // Predicated region
    $region34: #{tpu_custom_call.1} parent=1 // pred_check
      _
    $region35: #{tpu_custom_call.1} parent=1 // pred_check_branch
      %77 = sbr.rel (0) target = $region37
    $region36: #{tpu_custom_call.1} parent=1 // pred_region
      %78 = dma.done [#allocation7], 2048
    $region37: #{tpu_custom_call.1} parent=1 // pred_fallthru
      _
    // Predicated region
    $region38: #{tpu_custom_call.1} parent=1 // pred_check
      _
    $region39: #{tpu_custom_call.1} parent=1 // pred_check_branch
      %80 = sbr.rel (0) target = $region41
    $region40: #{tpu_custom_call.1} parent=1 // pred_region
      %81 = dma.done [#allocation10], 2048
    $region41: #{tpu_custom_call.1} parent=1 // pred_fallthru
      _
    %v82 = vld [vmem:[#allocation3] sm:$0xff]
    %v83 = vld [vmem:[#allocation3 + $0x8] sm:$0xff]
    %v84 = vld [vmem:[#allocation3 + $0x10] sm:$0xff]
    %v85 = vld [vmem:[#allocation3 + $0x18] sm:$0xff]
    %v86 = vld [vmem:[#allocation3 + $0x20] sm:$0xff]
    %v87 = vld [vmem:[#allocation3 + $0x28] sm:$0xff]
    %v88 = vld [vmem:[#allocation3 + $0x30] sm:$0xff]
    %v89 = vld [vmem:[#allocation3 + $0x38] sm:$0xff]
    %v90 = vld [vmem:[#allocation6] sm:$0xff]
    %v91 = vld [vmem:[#allocation6 + $0x8] sm:$0xff]
    %v92 = vld [vmem:[#allocation6 + $0x10] sm:$0xff]
    %v93 = vld [vmem:[#allocation6 + $0x18] sm:$0xff]
    %v94 = vld [vmem:[#allocation6 + $0x20] sm:$0xff]
    %v95 = vld [vmem:[#allocation6 + $0x28] sm:$0xff]
    %v96 = vld [vmem:[#allocation6 + $0x30] sm:$0xff]
    %v97 = vld [vmem:[#allocation6 + $0x38] sm:$0xff]
    %v98 = vld [vmem:[#allocation6 + $0x40] sm:$0xff]
    %v99 = vld [vmem:[#allocation6 + $0x48] sm:$0xff]
    %v100 = vld [vmem:[#allocation6 + $0x50] sm:$0xff]
    %v101 = vld [vmem:[#allocation6 + $0x58] sm:$0xff]
    %v102 = vld [vmem:[#allocation6 + $0x60] sm:$0xff]
    %v103 = vld [vmem:[#allocation6 + $0x68] sm:$0xff]
    %v104 = vld [vmem:[#allocation6 + $0x70] sm:$0xff]
    %v105 = vld [vmem:[#allocation6 + $0x78] sm:$0xff]
    %v106 = vld [vmem:[%s3] sm:$0x1]
    %v108 = vlaneseq
    %v109 = vshrl.u32 %v108, 7
    %v110 = vsub.s32 0, %v109
    %v111 = vrot.slane %v106, %v110
    %113 = vmatprep.subr.mxu0 0.0
    %114 = vmatpush1.msra.mxu0 %v90
    %115 = vmatprep.subr.mxu0 0.0
    %116 = vmatpush1.msra.mxu0 %v91
    %117 = vmatprep.subr.mxu0 0.0
    %118 = vmatpush1.msra.mxu0 %v92
    %119 = vmatprep.subr.mxu0 0.0
    %120 = vmatpush1.msra.mxu0 %v93
    %121 = vmatprep.subr.mxu0 0.0
    %122 = vmatpush1.msra.mxu0 %v94
    %123 = vmatprep.subr.mxu0 0.0
    %124 = vmatpush1.msra.mxu0 %v95
    %125 = vmatprep.subr.mxu0 0.0
    %126 = vmatpush1.msra.mxu0 %v96
    %127 = vmatprep.subr.mxu0 0.0
    %128 = vmatpush1.msra.mxu0 %v97
    %129 = vmatprep.subr.mxu0 0.0
    %130 = vmatpush1.msra.mxu0 %v98
    %131 = vmatprep.subr.mxu0 0.0
    %132 = vmatpush1.msra.mxu0 %v99
    %133 = vmatprep.subr.mxu0 0.0
    %134 = vmatpush1.msra.mxu0 %v100
    %135 = vmatprep.subr.mxu0 0.0
    %136 = vmatpush1.msra.mxu0 %v101
    %137 = vmatprep.subr.mxu0 0.0
    %138 = vmatpush1.msra.mxu0 %v102
    %139 = vmatprep.subr.mxu0 0.0
    %140 = vmatpush1.msra.mxu0 %v103
    %141 = vmatprep.subr.mxu0 0.0
    %142 = vmatpush1.msra.mxu0 %v104
    %143 = vmatprep.subr.mxu0 0.0
    %144 = vmatpush1.msra.mxu0 %v105
    %145 = vmatprep.subr.mxu0 0.0
    %146 = vmatpush1.msra.mxu0 0.0
    %147 = vmatprep.subr.mxu0 0.0
    %148 = vmatpush1.msra.mxu0 0.0
    %149 = vmatprep.subr.mxu0 0.0
    %150 = vmatpush1.msra.mxu0 0.0
    %151 = vmatprep.subr.mxu0 0.0
    %152 = vmatpush1.msra.mxu0 0.0
    %153 = vmatprep.subr.mxu0 0.0
    %154 = vmatpush1.msra.mxu0 0.0
    %155 = vmatprep.subr.mxu0 0.0
    %156 = vmatpush1.msra.mxu0 0.0
    %157 = vmatprep.subr.mxu0 0.0
    %158 = vmatpush1.msra.mxu0 0.0
    %159 = vmatprep.subr.mxu0 0.0
    %160 = vmatpush1.msra.mxu0 0.0
    %161 = vmatprep.subr.mxu0 0.0
    %162 = vmatpush1.msra.mxu0 0.0
    %163 = vmatprep.subr.mxu0 0.0
    %164 = vmatpush1.msra.mxu0 0.0
    %165 = vmatprep.subr.mxu0 0.0
    %166 = vmatpush1.msra.mxu0 0.0
    %167 = vmatprep.subr.mxu0 0.0
    %168 = vmatpush1.msra.mxu0 0.0
    %169 = vmatprep.subr.mxu0 0.0
    %170 = vmatpush1.msra.mxu0 0.0
    %171 = vmatprep.subr.mxu0 0.0
    %172 = vmatpush1.msra.mxu0 0.0
    %173 = vmatprep.subr.mxu0 0.0
    %174 = vmatpush1.msra.mxu0 0.0
    %175 = vmatprep.subr.mxu0 0.0
    %176 = vmatpush1.msra.mxu0 0.0
    %177 = vmatprep.mubr.f32.mxu0 0.0
    %178 = vmatmul.mubr.f32.gmra.mrb[0].mxu0 %v82
    %v179 = vpop.f32.mrb[0].mxu0
    %v180 = vadd.f32 %v111, %v179
    %v181 = vpop.f32.mrb[0].mxu0
    %182 = vmatprep.mubr.f32.mxu0 0.0
    %183 = vmatmul.mubr.f32.gmra.mrb[0].mxu0 %v83
    %v184 = vpop.f32.mrb[0].mxu0
    %v185 = vadd.f32 %v111, %v184
    %v186 = vpop.f32.mrb[0].mxu0
    %187 = vmatprep.mubr.f32.mxu0 0.0
    %188 = vmatmul.mubr.f32.gmra.mrb[0].mxu0 %v84
    %v189 = vpop.f32.mrb[0].mxu0
    %v190 = vadd.f32 %v111, %v189
    %v191 = vpop.f32.mrb[0].mxu0
    %192 = vmatprep.mubr.f32.mxu0 0.0
    %193 = vmatmul.mubr.f32.gmra.mrb[0].mxu0 %v85
    %v194 = vpop.f32.mrb[0].mxu0
    %v195 = vadd.f32 %v111, %v194
    %v196 = vpop.f32.mrb[0].mxu0
    %197 = vmatprep.mubr.f32.mxu0 0.0
    %198 = vmatmul.mubr.f32.gmra.mrb[0].mxu0 %v86
    %v199 = vpop.f32.mrb[0].mxu0
    %v200 = vadd.f32 %v111, %v199
    %v201 = vpop.f32.mrb[0].mxu0
    %202 = vmatprep.mubr.f32.mxu0 0.0
    %203 = vmatmul.mubr.f32.gmra.mrb[0].mxu0 %v87
    %v204 = vpop.f32.mrb[0].mxu0
    %v205 = vadd.f32 %v111, %v204
    %v206 = vpop.f32.mrb[0].mxu0
    %207 = vmatprep.mubr.f32.mxu0 0.0
    %208 = vmatmul.mubr.f32.gmra.mrb[0].mxu0 %v88
    %v209 = vpop.f32.mrb[0].mxu0
    %v210 = vadd.f32 %v111, %v209
    %v211 = vpop.f32.mrb[0].mxu0
    %212 = vmatprep.mubr.f32.mxu0 0.0
    %213 = vmatmul.mubr.f32.gmra.mrb[0].mxu0 %v89
    %v214 = vpop.f32.mrb[0].mxu0
    %v215 = vadd.f32 %v111, %v214
    %v216 = vpop.f32.mrb[0].mxu0
    %217 = vdwg.mxu0
    %218 = vst [vmem:[#allocation2] sm:$0xff] %v180
    %219 = vst [vmem:[#allocation2 + $0x8] sm:$0xff] %v185
    %220 = vst [vmem:[#allocation2 + $0x10] sm:$0xff] %v190
    %221 = vst [vmem:[#allocation2 + $0x18] sm:$0xff] %v195
    %222 = vst [vmem:[#allocation2 + $0x20] sm:$0xff] %v200
    %223 = vst [vmem:[#allocation2 + $0x28] sm:$0xff] %v205
    %224 = vst [vmem:[#allocation2 + $0x30] sm:$0xff] %v210
    %225 = vst [vmem:[#allocation2 + $0x38] sm:$0xff] %v215
    %v226 = vld [vmem:[#allocation8] sm:$0xff]
    %v227 = vld [vmem:[#allocation8 + $0x8] sm:$0xff]
    %v228 = vld [vmem:[#allocation8 + $0x10] sm:$0xff]
    %v229 = vld [vmem:[#allocation8 + $0x18] sm:$0xff]
    %v230 = vld [vmem:[#allocation8 + $0x20] sm:$0xff]
    %v231 = vld [vmem:[#allocation8 + $0x28] sm:$0xff]
    %v232 = vld [vmem:[#allocation8 + $0x30] sm:$0xff]
    %v233 = vld [vmem:[#allocation8 + $0x38] sm:$0xff]
    %v234 = vld [vmem:[#allocation8 + $0x40] sm:$0xff]
    %v235 = vld [vmem:[#allocation8 + $0x48] sm:$0xff]
    %v236 = vld [vmem:[#allocation8 + $0x50] sm:$0xff]
    %v237 = vld [vmem:[#allocation8 + $0x58] sm:$0xff]
    %v238 = vld [vmem:[#allocation8 + $0x60] sm:$0xff]
    %v239 = vld [vmem:[#allocation8 + $0x68] sm:$0xff]
    %v240 = vld [vmem:[#allocation8 + $0x70] sm:$0xff]
    %v241 = vld [vmem:[#allocation8 + $0x78] sm:$0xff]
    %v242 = vld [vmem:[#allocation9] sm:$0xff]
    %v243 = vld [vmem:[#allocation9 + $0x8] sm:$0xff]
    %v244 = vld [vmem:[#allocation9 + $0x10] sm:$0xff]
    %v245 = vld [vmem:[#allocation9 + $0x18] sm:$0xff]
    %v246 = vld [vmem:[#allocation9 + $0x20] sm:$0xff]
    %v247 = vld [vmem:[#allocation9 + $0x28] sm:$0xff]
    %v248 = vld [vmem:[#allocation9 + $0x30] sm:$0xff]
    %v249 = vld [vmem:[#allocation9 + $0x38] sm:$0xff]
    %v250 = vld [vmem:[#allocation9 + $0x40] sm:$0xff]
    %v251 = vld [vmem:[#allocation9 + $0x48] sm:$0xff]
    %v252 = vld [vmem:[#allocation9 + $0x50] sm:$0xff]
    %v253 = vld [vmem:[#allocation9 + $0x58] sm:$0xff]
    %v254 = vld [vmem:[#allocation9 + $0x60] sm:$0xff]
    %v255 = vld [vmem:[#allocation9 + $0x68] sm:$0xff]
    %v256 = vld [vmem:[#allocation9 + $0x70] sm:$0xff]
    %v257 = vld [vmem:[#allocation9 + $0x78] sm:$0xff]
    %v258 = vld [vmem:[%s5] sm:$0x1]
    %v259 = vld [vmem:[#allocation2] sm:$0xff]
    %v260 = vtanh.pop %v259
    %261 = vst [vmem:[#allocation12] sm:$0xff] %v260
    %v263 = vlaneseq
    %v264 = vshrl.u32 %v263, 7
    %v265 = vsub.s32 0, %v264
    %v266 = vrot.slane %v258, %v265
    %268 = vmatprep.subr.mxu0 0.0
    %269 = vmatpush1.msra.mxu0 %v242
    %270 = vmatprep.subr.mxu0 0.0
    %271 = vmatpush1.msra.mxu0 %v243
    %272 = vmatprep.subr.mxu0 0.0
    %273 = vmatpush1.msra.mxu0 %v244
    %274 = vmatprep.subr.mxu0 0.0
    %275 = vmatpush1.msra.mxu0 %v245
    %276 = vmatprep.subr.mxu0 0.0
    %277 = vmatpush1.msra.mxu0 %v246
    %278 = vmatprep.subr.mxu0 0.0
    %279 = vmatpush1.msra.mxu0 %v247
    %280 = vmatprep.subr.mxu0 0.0
    %281 = vmatpush1.msra.mxu0 %v248
    %282 = vmatprep.subr.mxu0 0.0
    %283 = vmatpush1.msra.mxu0 %v249
    %284 = vmatprep.subr.mxu0 0.0
    %285 = vmatpush1.msra.mxu0 %v250
    %286 = vmatprep.subr.mxu0 0.0
    %287 = vmatpush1.msra.mxu0 %v251
    %288 = vmatprep.subr.mxu0 0.0
    %289 = vmatpush1.msra.mxu0 %v252
    %290 = vmatprep.subr.mxu0 0.0
    %291 = vmatpush1.msra.mxu0 %v253
    %292 = vmatprep.subr.mxu0 0.0
    %293 = vmatpush1.msra.mxu0 %v254
    %294 = vmatprep.subr.mxu0 0.0
    %295 = vmatpush1.msra.mxu0 %v255
    %296 = vmatprep.subr.mxu0 0.0
    %297 = vmatpush1.msra.mxu0 %v256
    %298 = vmatprep.subr.mxu0 0.0
    %299 = vmatpush1.msra.mxu0 %v257
    %300 = vmatprep.subr.mxu0 0.0
    %301 = vmatpush1.msra.mxu0 0.0
    %302 = vmatprep.subr.mxu0 0.0
    %303 = vmatpush1.msra.mxu0 0.0
    %304 = vmatprep.subr.mxu0 0.0
    %305 = vmatpush1.msra.mxu0 0.0
    %306 = vmatprep.subr.mxu0 0.0
    %307 = vmatpush1.msra.mxu0 0.0
    %308 = vmatprep.subr.mxu0 0.0
    %309 = vmatpush1.msra.mxu0 0.0
    %310 = vmatprep.subr.mxu0 0.0
    %311 = vmatpush1.msra.mxu0 0.0
    %312 = vmatprep.subr.mxu0 0.0
    %313 = vmatpush1.msra.mxu0 0.0
    %314 = vmatprep.subr.mxu0 0.0
    %315 = vmatpush1.msra.mxu0 0.0
    %316 = vmatprep.subr.mxu0 0.0
    %317 = vmatpush1.msra.mxu0 0.0
    %318 = vmatprep.subr.mxu0 0.0
    %319 = vmatpush1.msra.mxu0 0.0
    %320 = vmatprep.subr.mxu0 0.0
    %321 = vmatpush1.msra.mxu0 0.0
    %322 = vmatprep.subr.mxu0 0.0
    %323 = vmatpush1.msra.mxu0 0.0
    %324 = vmatprep.subr.mxu0 0.0
    %325 = vmatpush1.msra.mxu0 0.0
    %326 = vmatprep.subr.mxu0 0.0
    %327 = vmatpush1.msra.mxu0 0.0
    %328 = vmatprep.subr.mxu0 0.0
    %329 = vmatpush1.msra.mxu0 0.0
    %330 = vmatprep.subr.mxu0 0.0
    %331 = vmatpush1.msra.mxu0 0.0
    %332 = vmatprep.mubr.f32.mxu0 0.0
    %333 = vmatmul.mubr.f32.gmra.mrb[0].mxu0 %v260
    %v334 = vpop.f32.mrb[0].mxu0
    %v335 = vadd.f32 %v266, %v334
    %v336 = vpop.f32.mrb[0].mxu0
    %337 = vdwg.mxu0
    %338 = vst [vmem:[#allocation11] sm:$0xff] %v335
    %s339 = scalar_lea.vmem [#allocation2], 8
    %v340 = vld [vmem:[%s339] sm:$0xff]
    %341 = vmatprep.subr.mxu0 0.0
    %342 = vmatpush1.msra.mxu0 %v226
    %343 = vmatprep.subr.mxu0 0.0
    %344 = vmatpush1.msra.mxu0 %v227
    %345 = vmatprep.subr.mxu0 0.0
    %346 = vmatpush1.msra.mxu0 %v228
    %347 = vmatprep.subr.mxu0 0.0
    %348 = vmatpush1.msra.mxu0 %v229
    %349 = vmatprep.subr.mxu0 0.0
    %350 = vmatpush1.msra.mxu0 %v230
    %351 = vmatprep.subr.mxu0 0.0
    %352 = vmatpush1.msra.mxu0 %v231
    %353 = vmatprep.subr.mxu0 0.0
    %354 = vmatpush1.msra.mxu0 %v232
    %355 = vmatprep.subr.mxu0 0.0
    %356 = vmatpush1.msra.mxu0 %v233
    %357 = vmatprep.subr.mxu0 0.0
    %358 = vmatpush1.msra.mxu0 %v234
    %359 = vmatprep.subr.mxu0 0.0
    %360 = vmatpush1.msra.mxu0 %v235
    %361 = vmatprep.subr.mxu0 0.0
    %362 = vmatpush1.msra.mxu0 %v236
    %363 = vmatprep.subr.mxu0 0.0
    %364 = vmatpush1.msra.mxu0 %v237
    %365 = vmatprep.subr.mxu0 0.0
    %366 = vmatpush1.msra.mxu0 %v238
    %367 = vmatprep.subr.mxu0 0.0
    %368 = vmatpush1.msra.mxu0 %v239
    %369 = vmatprep.subr.mxu0 0.0
    %370 = vmatpush1.msra.mxu0 %v240
    %371 = vmatprep.subr.mxu0 0.0
    %372 = vmatpush1.msra.mxu0 %v241
    %373 = vmatprep.subr.mxu0 0.0
    %374 = vmatpush1.msra.mxu0 0.0
    %375 = vmatprep.subr.mxu0 0.0
    %376 = vmatpush1.msra.mxu0 0.0
    %377 = vmatprep.subr.mxu0 0.0
    %378 = vmatpush1.msra.mxu0 0.0
    %379 = vmatprep.subr.mxu0 0.0
    %380 = vmatpush1.msra.mxu0 0.0
    %381 = vmatprep.subr.mxu0 0.0
    %382 = vmatpush1.msra.mxu0 0.0
    %383 = vmatprep.subr.mxu0 0.0
    %384 = vmatpush1.msra.mxu0 0.0
    %385 = vmatprep.subr.mxu0 0.0
    %386 = vmatpush1.msra.mxu0 0.0
    %387 = vmatprep.subr.mxu0 0.0
    %388 = vmatpush1.msra.mxu0 0.0
    %389 = vmatprep.subr.mxu0 0.0
    %390 = vmatpush1.msra.mxu0 0.0
    %391 = vmatprep.subr.mxu0 0.0
    %392 = vmatpush1.msra.mxu0 0.0
    %393 = vmatprep.subr.mxu0 0.0
    %394 = vmatpush1.msra.mxu0 0.0
    %395 = vmatprep.subr.mxu0 0.0
    %396 = vmatpush1.msra.mxu0 0.0
    %397 = vmatprep.subr.mxu0 0.0
    %398 = vmatpush1.msra.mxu0 0.0
    %399 = vmatprep.subr.mxu0 0.0
    %400 = vmatpush1.msra.mxu0 0.0
    %401 = vmatprep.subr.mxu0 0.0
    %402 = vmatpush1.msra.mxu0 0.0
    %403 = vmatprep.subr.mxu0 0.0
    %404 = vmatpush1.msra.mxu0 0.0
    %405 = vmatprep.mubr.f32.mxu0 0.0
    %406 = vmatmul.mubr.f32.gmra.mrb[0].mxu0 %v260
    %v407 = vpop.f32.mrb[0].mxu0
    %v408 = vadd.f32 0.0, %v407
    %v409 = vpop.f32.mrb[0].mxu0
    %410 = vdwg.mxu0
    %v411 = vadd.f32 %v340, %v408
    %v412 = vtanh.pop %v411
    %s413 = scalar_lea.vmem [#allocation12], 8
    %414 = vst [vmem:[%s413] sm:$0xff] %v412
    %415 = vmatprep.subr.mxu0 0.0
    %416 = vmatpush1.msra.mxu0 %v242
    %417 = vmatprep.subr.mxu0 0.0
    %418 = vmatpush1.msra.mxu0 %v243
    %419 = vmatprep.subr.mxu0 0.0
    %420 = vmatpush1.msra.mxu0 %v244
    %421 = vmatprep.subr.mxu0 0.0
    %422 = vmatpush1.msra.mxu0 %v245
    %423 = vmatprep.subr.mxu0 0.0
    %424 = vmatpush1.msra.mxu0 %v246
    %425 = vmatprep.subr.mxu0 0.0
    %426 = vmatpush1.msra.mxu0 %v247
    %427 = vmatprep.subr.mxu0 0.0
    %428 = vmatpush1.msra.mxu0 %v248
    %429 = vmatprep.subr.mxu0 0.0
    %430 = vmatpush1.msra.mxu0 %v249
    %431 = vmatprep.subr.mxu0 0.0
    %432 = vmatpush1.msra.mxu0 %v250
    %433 = vmatprep.subr.mxu0 0.0
    %434 = vmatpush1.msra.mxu0 %v251
    %435 = vmatprep.subr.mxu0 0.0
    %436 = vmatpush1.msra.mxu0 %v252
    %437 = vmatprep.subr.mxu0 0.0
    %438 = vmatpush1.msra.mxu0 %v253
    %439 = vmatprep.subr.mxu0 0.0
    %440 = vmatpush1.msra.mxu0 %v254
    %441 = vmatprep.subr.mxu0 0.0
    %442 = vmatpush1.msra.mxu0 %v255
    %443 = vmatprep.subr.mxu0 0.0
    %444 = vmatpush1.msra.mxu0 %v256
    %445 = vmatprep.subr.mxu0 0.0
    %446 = vmatpush1.msra.mxu0 %v257
    %447 = vmatprep.subr.mxu0 0.0
    %448 = vmatpush1.msra.mxu0 0.0
    %449 = vmatprep.subr.mxu0 0.0
    %450 = vmatpush1.msra.mxu0 0.0
    %451 = vmatprep.subr.mxu0 0.0
    %452 = vmatpush1.msra.mxu0 0.0
    %453 = vmatprep.subr.mxu0 0.0
    %454 = vmatpush1.msra.mxu0 0.0
    %455 = vmatprep.subr.mxu0 0.0
    %456 = vmatpush1.msra.mxu0 0.0
    %457 = vmatprep.subr.mxu0 0.0
    %458 = vmatpush1.msra.mxu0 0.0
    %459 = vmatprep.subr.mxu0 0.0
    %460 = vmatpush1.msra.mxu0 0.0
    %461 = vmatprep.subr.mxu0 0.0
    %462 = vmatpush1.msra.mxu0 0.0
    %463 = vmatprep.subr.mxu0 0.0
    %464 = vmatpush1.msra.mxu0 0.0
    %465 = vmatprep.subr.mxu0 0.0
    %466 = vmatpush1.msra.mxu0 0.0
    %467 = vmatprep.subr.mxu0 0.0
    %468 = vmatpush1.msra.mxu0 0.0
    %469 = vmatprep.subr.mxu0 0.0
    %470 = vmatpush1.msra.mxu0 0.0
    %471 = vmatprep.subr.mxu0 0.0
    %472 = vmatpush1.msra.mxu0 0.0
    %473 = vmatprep.subr.mxu0 0.0
    %474 = vmatpush1.msra.mxu0 0.0
    %475 = vmatprep.subr.mxu0 0.0
    %476 = vmatpush1.msra.mxu0 0.0
    %477 = vmatprep.subr.mxu0 0.0
    %478 = vmatpush1.msra.mxu0 0.0
    %479 = vmatprep.mubr.f32.mxu0 0.0
    %480 = vmatmul.mubr.f32.gmra.mrb[0].mxu0 %v412
    %v481 = vpop.f32.mrb[0].mxu0
    %v482 = vadd.f32 %v266, %v481
    %v483 = vpop.f32.mrb[0].mxu0
    %484 = vdwg.mxu0
    %s485 = scalar_lea.vmem [#allocation11], 8
    %486 = vst [vmem:[%s485] sm:$0xff] %v482
    %s487 = scalar_lea.vmem [#allocation2], 16
    %v488 = vld [vmem:[%s487] sm:$0xff]
    %489 = vmatprep.subr.mxu0 0.0
    %490 = vmatpush1.msra.mxu0 %v226
    %491 = vmatprep.subr.mxu0 0.0
    %492 = vmatpush1.msra.mxu0 %v227
    %493 = vmatprep.subr.mxu0 0.0
    %494 = vmatpush1.msra.mxu0 %v228
    %495 = vmatprep.subr.mxu0 0.0
    %496 = vmatpush1.msra.mxu0 %v229
    %497 = vmatprep.subr.mxu0 0.0
    %498 = vmatpush1.msra.mxu0 %v230
    %499 = vmatprep.subr.mxu0 0.0
    %500 = vmatpush1.msra.mxu0 %v231
    %501 = vmatprep.subr.mxu0 0.0
    %502 = vmatpush1.msra.mxu0 %v232
    %503 = vmatprep.subr.mxu0 0.0
    %504 = vmatpush1.msra.mxu0 %v233
    %505 = vmatprep.subr.mxu0 0.0
    %506 = vmatpush1.msra.mxu0 %v234
    %507 = vmatprep.subr.mxu0 0.0
    %508 = vmatpush1.msra.mxu0 %v235
    %509 = vmatprep.subr.mxu0 0.0
    %510 = vmatpush1.msra.mxu0 %v236
    %511 = vmatprep.subr.mxu0 0.0
    %512 = vmatpush1.msra.mxu0 %v237
    %513 = vmatprep.subr.mxu0 0.0
    %514 = vmatpush1.msra.mxu0 %v238
    %515 = vmatprep.subr.mxu0 0.0
    %516 = vmatpush1.msra.mxu0 %v239
    %517 = vmatprep.subr.mxu0 0.0
    %518 = vmatpush1.msra.mxu0 %v240
    %519 = vmatprep.subr.mxu0 0.0
    %520 = vmatpush1.msra.mxu0 %v241
    %521 = vmatprep.subr.mxu0 0.0
    %522 = vmatpush1.msra.mxu0 0.0
    %523 = vmatprep.subr.mxu0 0.0
    %524 = vmatpush1.msra.mxu0 0.0
    %525 = vmatprep.subr.mxu0 0.0
    %526 = vmatpush1.msra.mxu0 0.0
    %527 = vmatprep.subr.mxu0 0.0
    %528 = vmatpush1.msra.mxu0 0.0
    %529 = vmatprep.subr.mxu0 0.0
    %530 = vmatpush1.msra.mxu0 0.0
    %531 = vmatprep.subr.mxu0 0.0
    %532 = vmatpush1.msra.mxu0 0.0
    %533 = vmatprep.subr.mxu0 0.0
    %534 = vmatpush1.msra.mxu0 0.0
    %535 = vmatprep.subr.mxu0 0.0
    %536 = vmatpush1.msra.mxu0 0.0
    %537 = vmatprep.subr.mxu0 0.0
    %538 = vmatpush1.msra.mxu0 0.0
    %539 = vmatprep.subr.mxu0 0.0
    %540 = vmatpush1.msra.mxu0 0.0
    %541 = vmatprep.subr.mxu0 0.0
    %542 = vmatpush1.msra.mxu0 0.0
    %543 = vmatprep.subr.mxu0 0.0
    %544 = vmatpush1.msra.mxu0 0.0
    %545 = vmatprep.subr.mxu0 0.0
    %546 = vmatpush1.msra.mxu0 0.0
    %547 = vmatprep.subr.mxu0 0.0
    %548 = vmatpush1.msra.mxu0 0.0
    %549 = vmatprep.subr.mxu0 0.0
    %550 = vmatpush1.msra.mxu0 0.0
    %551 = vmatprep.subr.mxu0 0.0
    %552 = vmatpush1.msra.mxu0 0.0
    %553 = vmatprep.mubr.f32.mxu0 0.0
    %554 = vmatmul.mubr.f32.gmra.mrb[0].mxu0 %v412
    %v555 = vpop.f32.mrb[0].mxu0
    %v556 = vadd.f32 0.0, %v555
    %v557 = vpop.f32.mrb[0].mxu0
    %558 = vdwg.mxu0
    %v559 = vadd.f32 %v488, %v556
    %v560 = vtanh.pop %v559
    %s561 = scalar_lea.vmem [#allocation12], 16
    %562 = vst [vmem:[%s561] sm:$0xff] %v560
    %563 = vmatprep.subr.mxu0 0.0
    %564 = vmatpush1.msra.mxu0 %v242
    %565 = vmatprep.subr.mxu0 0.0
    %566 = vmatpush1.msra.mxu0 %v243
    %567 = vmatprep.subr.mxu0 0.0
    %568 = vmatpush1.msra.mxu0 %v244
    %569 = vmatprep.subr.mxu0 0.0
    %570 = vmatpush1.msra.mxu0 %v245
    %571 = vmatprep.subr.mxu0 0.0
    %572 = vmatpush1.msra.mxu0 %v246
    %573 = vmatprep.subr.mxu0 0.0
    %574 = vmatpush1.msra.mxu0 %v247
    %575 = vmatprep.subr.mxu0 0.0
    %576 = vmatpush1.msra.mxu0 %v248
    %577 = vmatprep.subr.mxu0 0.0
    %578 = vmatpush1.msra.mxu0 %v249
    %579 = vmatprep.subr.mxu0 0.0
    %580 = vmatpush1.msra.mxu0 %v250
    %581 = vmatprep.subr.mxu0 0.0
    %582 = vmatpush1.msra.mxu0 %v251
    %583 = vmatprep.subr.mxu0 0.0
    %584 = vmatpush1.msra.mxu0 %v252
    %585 = vmatprep.subr.mxu0 0.0
    %586 = vmatpush1.msra.mxu0 %v253
    %587 = vmatprep.subr.mxu0 0.0
    %588 = vmatpush1.msra.mxu0 %v254
    %589 = vmatprep.subr.mxu0 0.0
    %590 = vmatpush1.msra.mxu0 %v255
    %591 = vmatprep.subr.mxu0 0.0
    %592 = vmatpush1.msra.mxu0 %v256
    %593 = vmatprep.subr.mxu0 0.0
    %594 = vmatpush1.msra.mxu0 %v257
    %595 = vmatprep.subr.mxu0 0.0
    %596 = vmatpush1.msra.mxu0 0.0
    %597 = vmatprep.subr.mxu0 0.0
    %598 = vmatpush1.msra.mxu0 0.0
    %599 = vmatprep.subr.mxu0 0.0
    %600 = vmatpush1.msra.mxu0 0.0
    %601 = vmatprep.subr.mxu0 0.0
    %602 = vmatpush1.msra.mxu0 0.0
    %603 = vmatprep.subr.mxu0 0.0
    %604 = vmatpush1.msra.mxu0 0.0
    %605 = vmatprep.subr.mxu0 0.0
    %606 = vmatpush1.msra.mxu0 0.0
    %607 = vmatprep.subr.mxu0 0.0
    %608 = vmatpush1.msra.mxu0 0.0
    %609 = vmatprep.subr.mxu0 0.0
    %610 = vmatpush1.msra.mxu0 0.0
    %611 = vmatprep.subr.mxu0 0.0
    %612 = vmatpush1.msra.mxu0 0.0
    %613 = vmatprep.subr.mxu0 0.0
    %614 = vmatpush1.msra.mxu0 0.0
    %615 = vmatprep.subr.mxu0 0.0
    %616 = vmatpush1.msra.mxu0 0.0
    %617 = vmatprep.subr.mxu0 0.0
    %618 = vmatpush1.msra.mxu0 0.0
    %619 = vmatprep.subr.mxu0 0.0
    %620 = vmatpush1.msra.mxu0 0.0
    %621 = vmatprep.subr.mxu0 0.0
    %622 = vmatpush1.msra.mxu0 0.0
    %623 = vmatprep.subr.mxu0 0.0
    %624 = vmatpush1.msra.mxu0 0.0
    %625 = vmatprep.subr.mxu0 0.0
    %626 = vmatpush1.msra.mxu0 0.0
    %627 = vmatprep.mubr.f32.mxu0 0.0
    %628 = vmatmul.mubr.f32.gmra.mrb[0].mxu0 %v560
    %v629 = vpop.f32.mrb[0].mxu0
    %v630 = vadd.f32 %v266, %v629
    %v631 = vpop.f32.mrb[0].mxu0
    %632 = vdwg.mxu0
    %s633 = scalar_lea.vmem [#allocation11], 16
    %634 = vst [vmem:[%s633] sm:$0xff] %v630
    %s635 = scalar_lea.vmem [#allocation2], 24
    %v636 = vld [vmem:[%s635] sm:$0xff]
    %637 = vmatprep.subr.mxu0 0.0
    %638 = vmatpush1.msra.mxu0 %v226
    %639 = vmatprep.subr.mxu0 0.0
    %640 = vmatpush1.msra.mxu0 %v227
    %641 = vmatprep.subr.mxu0 0.0
    %642 = vmatpush1.msra.mxu0 %v228
    %643 = vmatprep.subr.mxu0 0.0
    %644 = vmatpush1.msra.mxu0 %v229
    %645 = vmatprep.subr.mxu0 0.0
    %646 = vmatpush1.msra.mxu0 %v230
    %647 = vmatprep.subr.mxu0 0.0
    %648 = vmatpush1.msra.mxu0 %v231
    %649 = vmatprep.subr.mxu0 0.0
    %650 = vmatpush1.msra.mxu0 %v232
    %651 = vmatprep.subr.mxu0 0.0
    %652 = vmatpush1.msra.mxu0 %v233
    %653 = vmatprep.subr.mxu0 0.0
    %654 = vmatpush1.msra.mxu0 %v234
    %655 = vmatprep.subr.mxu0 0.0
    %656 = vmatpush1.msra.mxu0 %v235
    %657 = vmatprep.subr.mxu0 0.0
    %658 = vmatpush1.msra.mxu0 %v236
    %659 = vmatprep.subr.mxu0 0.0
    %660 = vmatpush1.msra.mxu0 %v237
    %661 = vmatprep.subr.mxu0 0.0
    %662 = vmatpush1.msra.mxu0 %v238
    %663 = vmatprep.subr.mxu0 0.0
    %664 = vmatpush1.msra.mxu0 %v239
    %665 = vmatprep.subr.mxu0 0.0
    %666 = vmatpush1.msra.mxu0 %v240
    %667 = vmatprep.subr.mxu0 0.0
    %668 = vmatpush1.msra.mxu0 %v241
    %669 = vmatprep.subr.mxu0 0.0
    %670 = vmatpush1.msra.mxu0 0.0
    %671 = vmatprep.subr.mxu0 0.0
    %672 = vmatpush1.msra.mxu0 0.0
    %673 = vmatprep.subr.mxu0 0.0
    %674 = vmatpush1.msra.mxu0 0.0
    %675 = vmatprep.subr.mxu0 0.0
    %676 = vmatpush1.msra.mxu0 0.0
    %677 = vmatprep.subr.mxu0 0.0
    %678 = vmatpush1.msra.mxu0 0.0
    %679 = vmatprep.subr.mxu0 0.0
    %680 = vmatpush1.msra.mxu0 0.0
    %681 = vmatprep.subr.mxu0 0.0
    %682 = vmatpush1.msra.mxu0 0.0
    %683 = vmatprep.subr.mxu0 0.0
    %684 = vmatpush1.msra.mxu0 0.0
    %685 = vmatprep.subr.mxu0 0.0
    %686 = vmatpush1.msra.mxu0 0.0
    %687 = vmatprep.subr.mxu0 0.0
    %688 = vmatpush1.msra.mxu0 0.0
    %689 = vmatprep.subr.mxu0 0.0
    %690 = vmatpush1.msra.mxu0 0.0
    %691 = vmatprep.subr.mxu0 0.0
    %692 = vmatpush1.msra.mxu0 0.0
    %693 = vmatprep.subr.mxu0 0.0
    %694 = vmatpush1.msra.mxu0 0.0
    %695 = vmatprep.subr.mxu0 0.0
    %696 = vmatpush1.msra.mxu0 0.0
    %697 = vmatprep.subr.mxu0 0.0
    %698 = vmatpush1.msra.mxu0 0.0
    %699 = vmatprep.subr.mxu0 0.0
    %700 = vmatpush1.msra.mxu0 0.0
    %701 = vmatprep.mubr.f32.mxu0 0.0
    %702 = vmatmul.mubr.f32.gmra.mrb[0].mxu0 %v560
    %v703 = vpop.f32.mrb[0].mxu0
    %v704 = vadd.f32 0.0, %v703
    %v705 = vpop.f32.mrb[0].mxu0
    %706 = vdwg.mxu0
    %v707 = vadd.f32 %v636, %v704
    %v708 = vtanh.pop %v707
    %s709 = scalar_lea.vmem [#allocation12], 24
    %710 = vst [vmem:[%s709] sm:$0xff] %v708
    %711 = vmatprep.subr.mxu0 0.0
    %712 = vmatpush1.msra.mxu0 %v242
    %713 = vmatprep.subr.mxu0 0.0
    %714 = vmatpush1.msra.mxu0 %v243
    %715 = vmatprep.subr.mxu0 0.0
    %716 = vmatpush1.msra.mxu0 %v244
    %717 = vmatprep.subr.mxu0 0.0
    %718 = vmatpush1.msra.mxu0 %v245
    %719 = vmatprep.subr.mxu0 0.0
    %720 = vmatpush1.msra.mxu0 %v246
    %721 = vmatprep.subr.mxu0 0.0
    %722 = vmatpush1.msra.mxu0 %v247
    %723 = vmatprep.subr.mxu0 0.0
    %724 = vmatpush1.msra.mxu0 %v248
    %725 = vmatprep.subr.mxu0 0.0
    %726 = vmatpush1.msra.mxu0 %v249
    %727 = vmatprep.subr.mxu0 0.0
    %728 = vmatpush1.msra.mxu0 %v250
    %729 = vmatprep.subr.mxu0 0.0
    %730 = vmatpush1.msra.mxu0 %v251
    %731 = vmatprep.subr.mxu0 0.0
    %732 = vmatpush1.msra.mxu0 %v252
    %733 = vmatprep.subr.mxu0 0.0
    %734 = vmatpush1.msra.mxu0 %v253
    %735 = vmatprep.subr.mxu0 0.0
    %736 = vmatpush1.msra.mxu0 %v254
    %737 = vmatprep.subr.mxu0 0.0
    %738 = vmatpush1.msra.mxu0 %v255
    %739 = vmatprep.subr.mxu0 0.0
    %740 = vmatpush1.msra.mxu0 %v256
    %741 = vmatprep.subr.mxu0 0.0
    %742 = vmatpush1.msra.mxu0 %v257
    %743 = vmatprep.subr.mxu0 0.0
    %744 = vmatpush1.msra.mxu0 0.0
    %745 = vmatprep.subr.mxu0 0.0
    %746 = vmatpush1.msra.mxu0 0.0
    %747 = vmatprep.subr.mxu0 0.0
    %748 = vmatpush1.msra.mxu0 0.0
    %749 = vmatprep.subr.mxu0 0.0
    %750 = vmatpush1.msra.mxu0 0.0
    %751 = vmatprep.subr.mxu0 0.0
    %752 = vmatpush1.msra.mxu0 0.0
    %753 = vmatprep.subr.mxu0 0.0
    %754 = vmatpush1.msra.mxu0 0.0
    %755 = vmatprep.subr.mxu0 0.0
    %756 = vmatpush1.msra.mxu0 0.0
    %757 = vmatprep.subr.mxu0 0.0
    %758 = vmatpush1.msra.mxu0 0.0
    %759 = vmatprep.subr.mxu0 0.0
    %760 = vmatpush1.msra.mxu0 0.0
    %761 = vmatprep.subr.mxu0 0.0
    %762 = vmatpush1.msra.mxu0 0.0
    %763 = vmatprep.subr.mxu0 0.0
    %764 = vmatpush1.msra.mxu0 0.0
    %765 = vmatprep.subr.mxu0 0.0
    %766 = vmatpush1.msra.mxu0 0.0
    %767 = vmatprep.subr.mxu0 0.0
    %768 = vmatpush1.msra.mxu0 0.0
    %769 = vmatprep.subr.mxu0 0.0
    %770 = vmatpush1.msra.mxu0 0.0
    %771 = vmatprep.subr.mxu0 0.0
    %772 = vmatpush1.msra.mxu0 0.0
    %773 = vmatprep.subr.mxu0 0.0
    %774 = vmatpush1.msra.mxu0 0.0
    %775 = vmatprep.mubr.f32.mxu0 0.0
    %776 = vmatmul.mubr.f32.gmra.mrb[0].mxu0 %v708
    %v777 = vpop.f32.mrb[0].mxu0
    %v778 = vadd.f32 %v266, %v777
    %v779 = vpop.f32.mrb[0].mxu0
    %780 = vdwg.mxu0
    %s781 = scalar_lea.vmem [#allocation11], 24
    %782 = vst [vmem:[%s781] sm:$0xff] %v778
    %s783 = scalar_lea.vmem [#allocation2], 32
    %v784 = vld [vmem:[%s783] sm:$0xff]
    %785 = vmatprep.subr.mxu0 0.0
    %786 = vmatpush1.msra.mxu0 %v226
    %787 = vmatprep.subr.mxu0 0.0
    %788 = vmatpush1.msra.mxu0 %v227
    %789 = vmatprep.subr.mxu0 0.0
    %790 = vmatpush1.msra.mxu0 %v228
    %791 = vmatprep.subr.mxu0 0.0
    %792 = vmatpush1.msra.mxu0 %v229
    %793 = vmatprep.subr.mxu0 0.0
    %794 = vmatpush1.msra.mxu0 %v230
    %795 = vmatprep.subr.mxu0 0.0
    %796 = vmatpush1.msra.mxu0 %v231
    %797 = vmatprep.subr.mxu0 0.0
    %798 = vmatpush1.msra.mxu0 %v232
    %799 = vmatprep.subr.mxu0 0.0
    %800 = vmatpush1.msra.mxu0 %v233
    %801 = vmatprep.subr.mxu0 0.0
    %802 = vmatpush1.msra.mxu0 %v234
    %803 = vmatprep.subr.mxu0 0.0
    %804 = vmatpush1.msra.mxu0 %v235
    %805 = vmatprep.subr.mxu0 0.0
    %806 = vmatpush1.msra.mxu0 %v236
    %807 = vmatprep.subr.mxu0 0.0
    %808 = vmatpush1.msra.mxu0 %v237
    %809 = vmatprep.subr.mxu0 0.0
    %810 = vmatpush1.msra.mxu0 %v238
    %811 = vmatprep.subr.mxu0 0.0
    %812 = vmatpush1.msra.mxu0 %v239
    %813 = vmatprep.subr.mxu0 0.0
    %814 = vmatpush1.msra.mxu0 %v240
    %815 = vmatprep.subr.mxu0 0.0
    %816 = vmatpush1.msra.mxu0 %v241
    %817 = vmatprep.subr.mxu0 0.0
    %818 = vmatpush1.msra.mxu0 0.0
    %819 = vmatprep.subr.mxu0 0.0
    %820 = vmatpush1.msra.mxu0 0.0
    %821 = vmatprep.subr.mxu0 0.0
    %822 = vmatpush1.msra.mxu0 0.0
    %823 = vmatprep.subr.mxu0 0.0
    %824 = vmatpush1.msra.mxu0 0.0
    %825 = vmatprep.subr.mxu0 0.0
    %826 = vmatpush1.msra.mxu0 0.0
    %827 = vmatprep.subr.mxu0 0.0
    %828 = vmatpush1.msra.mxu0 0.0
    %829 = vmatprep.subr.mxu0 0.0
    %830 = vmatpush1.msra.mxu0 0.0
    %831 = vmatprep.subr.mxu0 0.0
    %832 = vmatpush1.msra.mxu0 0.0
    %833 = vmatprep.subr.mxu0 0.0
    %834 = vmatpush1.msra.mxu0 0.0
    %835 = vmatprep.subr.mxu0 0.0
    %836 = vmatpush1.msra.mxu0 0.0
    %837 = vmatprep.subr.mxu0 0.0
    %838 = vmatpush1.msra.mxu0 0.0
    %839 = vmatprep.subr.mxu0 0.0
    %840 = vmatpush1.msra.mxu0 0.0
    %841 = vmatprep.subr.mxu0 0.0
    %842 = vmatpush1.msra.mxu0 0.0
    %843 = vmatprep.subr.mxu0 0.0
    %844 = vmatpush1.msra.mxu0 0.0
    %845 = vmatprep.subr.mxu0 0.0
    %846 = vmatpush1.msra.mxu0 0.0
    %847 = vmatprep.subr.mxu0 0.0
    %848 = vmatpush1.msra.mxu0 0.0
    %849 = vmatprep.mubr.f32.mxu0 0.0
    %850 = vmatmul.mubr.f32.gmra.mrb[0].mxu0 %v708
    %v851 = vpop.f32.mrb[0].mxu0
    %v852 = vadd.f32 0.0, %v851
    %v853 = vpop.f32.mrb[0].mxu0
    %854 = vdwg.mxu0
    %v855 = vadd.f32 %v784, %v852
    %v856 = vtanh.pop %v855
    %s857 = scalar_lea.vmem [#allocation12], 32
    %858 = vst [vmem:[%s857] sm:$0xff] %v856
    %859 = vmatprep.subr.mxu0 0.0
    %860 = vmatpush1.msra.mxu0 %v242
    %861 = vmatprep.subr.mxu0 0.0
    %862 = vmatpush1.msra.mxu0 %v243
    %863 = vmatprep.subr.mxu0 0.0
    %864 = vmatpush1.msra.mxu0 %v244
    %865 = vmatprep.subr.mxu0 0.0
    %866 = vmatpush1.msra.mxu0 %v245
    %867 = vmatprep.subr.mxu0 0.0
    %868 = vmatpush1.msra.mxu0 %v246
    %869 = vmatprep.subr.mxu0 0.0
    %870 = vmatpush1.msra.mxu0 %v247
    %871 = vmatprep.subr.mxu0 0.0
    %872 = vmatpush1.msra.mxu0 %v248
    %873 = vmatprep.subr.mxu0 0.0
    %874 = vmatpush1.msra.mxu0 %v249
    %875 = vmatprep.subr.mxu0 0.0
    %876 = vmatpush1.msra.mxu0 %v250
    %877 = vmatprep.subr.mxu0 0.0
    %878 = vmatpush1.msra.mxu0 %v251
    %879 = vmatprep.subr.mxu0 0.0
    %880 = vmatpush1.msra.mxu0 %v252
    %881 = vmatprep.subr.mxu0 0.0
    %882 = vmatpush1.msra.mxu0 %v253
    %883 = vmatprep.subr.mxu0 0.0
    %884 = vmatpush1.msra.mxu0 %v254
    %885 = vmatprep.subr.mxu0 0.0
    %886 = vmatpush1.msra.mxu0 %v255
    %887 = vmatprep.subr.mxu0 0.0
    %888 = vmatpush1.msra.mxu0 %v256
    %889 = vmatprep.subr.mxu0 0.0
    %890 = vmatpush1.msra.mxu0 %v257
    %891 = vmatprep.subr.mxu0 0.0
    %892 = vmatpush1.msra.mxu0 0.0
    %893 = vmatprep.subr.mxu0 0.0
    %894 = vmatpush1.msra.mxu0 0.0
    %895 = vmatprep.subr.mxu0 0.0
    %896 = vmatpush1.msra.mxu0 0.0
    %897 = vmatprep.subr.mxu0 0.0
    %898 = vmatpush1.msra.mxu0 0.0
    %899 = vmatprep.subr.mxu0 0.0
    %900 = vmatpush1.msra.mxu0 0.0
    %901 = vmatprep.subr.mxu0 0.0
    %902 = vmatpush1.msra.mxu0 0.0
    %903 = vmatprep.subr.mxu0 0.0
    %904 = vmatpush1.msra.mxu0 0.0
    %905 = vmatprep.subr.mxu0 0.0
    %906 = vmatpush1.msra.mxu0 0.0
    %907 = vmatprep.subr.mxu0 0.0
    %908 = vmatpush1.msra.mxu0 0.0
    %909 = vmatprep.subr.mxu0 0.0
    %910 = vmatpush1.msra.mxu0 0.0
    %911 = vmatprep.subr.mxu0 0.0
    %912 = vmatpush1.msra.mxu0 0.0
    %913 = vmatprep.subr.mxu0 0.0
    %914 = vmatpush1.msra.mxu0 0.0
    %915 = vmatprep.subr.mxu0 0.0
    %916 = vmatpush1.msra.mxu0 0.0
    %917 = vmatprep.subr.mxu0 0.0
    %918 = vmatpush1.msra.mxu0 0.0
    %919 = vmatprep.subr.mxu0 0.0
    %920 = vmatpush1.msra.mxu0 0.0
    %921 = vmatprep.subr.mxu0 0.0
    %922 = vmatpush1.msra.mxu0 0.0
    %923 = vmatprep.mubr.f32.mxu0 0.0
    %924 = vmatmul.mubr.f32.gmra.mrb[0].mxu0 %v856
    %v925 = vpop.f32.mrb[0].mxu0
    %v926 = vadd.f32 %v266, %v925
    %v927 = vpop.f32.mrb[0].mxu0
    %928 = vdwg.mxu0
    %s929 = scalar_lea.vmem [#allocation11], 32
    %930 = vst [vmem:[%s929] sm:$0xff] %v926
    %s931 = scalar_lea.vmem [#allocation2], 40
    %v932 = vld [vmem:[%s931] sm:$0xff]
    %933 = vmatprep.subr.mxu0 0.0
    %934 = vmatpush1.msra.mxu0 %v226
    %935 = vmatprep.subr.mxu0 0.0
    %936 = vmatpush1.msra.mxu0 %v227
    %937 = vmatprep.subr.mxu0 0.0
    %938 = vmatpush1.msra.mxu0 %v228
    %939 = vmatprep.subr.mxu0 0.0
    %940 = vmatpush1.msra.mxu0 %v229
    %941 = vmatprep.subr.mxu0 0.0
    %942 = vmatpush1.msra.mxu0 %v230
    %943 = vmatprep.subr.mxu0 0.0
    %944 = vmatpush1.msra.mxu0 %v231
    %945 = vmatprep.subr.mxu0 0.0
    %946 = vmatpush1.msra.mxu0 %v232
    %947 = vmatprep.subr.mxu0 0.0
    %948 = vmatpush1.msra.mxu0 %v233
    %949 = vmatprep.subr.mxu0 0.0
    %950 = vmatpush1.msra.mxu0 %v234
    %951 = vmatprep.subr.mxu0 0.0
    %952 = vmatpush1.msra.mxu0 %v235
    %953 = vmatprep.subr.mxu0 0.0
    %954 = vmatpush1.msra.mxu0 %v236
    %955 = vmatprep.subr.mxu0 0.0
    %956 = vmatpush1.msra.mxu0 %v237
    %957 = vmatprep.subr.mxu0 0.0
    %958 = vmatpush1.msra.mxu0 %v238
    %959 = vmatprep.subr.mxu0 0.0
    %960 = vmatpush1.msra.mxu0 %v239
    %961 = vmatprep.subr.mxu0 0.0
    %962 = vmatpush1.msra.mxu0 %v240
    %963 = vmatprep.subr.mxu0 0.0
    %964 = vmatpush1.msra.mxu0 %v241
    %965 = vmatprep.subr.mxu0 0.0
    %966 = vmatpush1.msra.mxu0 0.0
    %967 = vmatprep.subr.mxu0 0.0
    %968 = vmatpush1.msra.mxu0 0.0
    %969 = vmatprep.subr.mxu0 0.0
    %970 = vmatpush1.msra.mxu0 0.0
    %971 = vmatprep.subr.mxu0 0.0
    %972 = vmatpush1.msra.mxu0 0.0
    %973 = vmatprep.subr.mxu0 0.0
    %974 = vmatpush1.msra.mxu0 0.0
    %975 = vmatprep.subr.mxu0 0.0
    %976 = vmatpush1.msra.mxu0 0.0
    %977 = vmatprep.subr.mxu0 0.0
    %978 = vmatpush1.msra.mxu0 0.0
    %979 = vmatprep.subr.mxu0 0.0
    %980 = vmatpush1.msra.mxu0 0.0
    %981 = vmatprep.subr.mxu0 0.0
    %982 = vmatpush1.msra.mxu0 0.0
    %983 = vmatprep.subr.mxu0 0.0
    %984 = vmatpush1.msra.mxu0 0.0
    %985 = vmatprep.subr.mxu0 0.0
    %986 = vmatpush1.msra.mxu0 0.0
    %987 = vmatprep.subr.mxu0 0.0
    %988 = vmatpush1.msra.mxu0 0.0
    %989 = vmatprep.subr.mxu0 0.0
    %990 = vmatpush1.msra.mxu0 0.0
    %991 = vmatprep.subr.mxu0 0.0
    %992 = vmatpush1.msra.mxu0 0.0
    %993 = vmatprep.subr.mxu0 0.0
    %994 = vmatpush1.msra.mxu0 0.0
    %995 = vmatprep.subr.mxu0 0.0
    %996 = vmatpush1.msra.mxu0 0.0
    %997 = vmatprep.mubr.f32.mxu0 0.0
    %998 = vmatmul.mubr.f32.gmra.mrb[0].mxu0 %v856
    %v999 = vpop.f32.mrb[0].mxu0
    %v1000 = vadd.f32 0.0, %v999
    %v1001 = vpop.f32.mrb[0].mxu0
    %1002 = vdwg.mxu0
    %v1003 = vadd.f32 %v932, %v1000
    %v1004 = vtanh.pop %v1003
    %s1005 = scalar_lea.vmem [#allocation12], 40
    %1006 = vst [vmem:[%s1005] sm:$0xff] %v1004
    %1007 = vmatprep.subr.mxu0 0.0
    %1008 = vmatpush1.msra.mxu0 %v242
    %1009 = vmatprep.subr.mxu0 0.0
    %1010 = vmatpush1.msra.mxu0 %v243
    %1011 = vmatprep.subr.mxu0 0.0
    %1012 = vmatpush1.msra.mxu0 %v244
    %1013 = vmatprep.subr.mxu0 0.0
    %1014 = vmatpush1.msra.mxu0 %v245
    %1015 = vmatprep.subr.mxu0 0.0
    %1016 = vmatpush1.msra.mxu0 %v246
    %1017 = vmatprep.subr.mxu0 0.0
    %1018 = vmatpush1.msra.mxu0 %v247
    %1019 = vmatprep.subr.mxu0 0.0
    %1020 = vmatpush1.msra.mxu0 %v248
    %1021 = vmatprep.subr.mxu0 0.0
    %1022 = vmatpush1.msra.mxu0 %v249
    %1023 = vmatprep.subr.mxu0 0.0
    %1024 = vmatpush1.msra.mxu0 %v250
    %1025 = vmatprep.subr.mxu0 0.0
    %1026 = vmatpush1.msra.mxu0 %v251
    %1027 = vmatprep.subr.mxu0 0.0
    %1028 = vmatpush1.msra.mxu0 %v252
    %1029 = vmatprep.subr.mxu0 0.0
    %1030 = vmatpush1.msra.mxu0 %v253
    %1031 = vmatprep.subr.mxu0 0.0
    %1032 = vmatpush1.msra.mxu0 %v254
    %1033 = vmatprep.subr.mxu0 0.0
    %1034 = vmatpush1.msra.mxu0 %v255
    %1035 = vmatprep.subr.mxu0 0.0
    %1036 = vmatpush1.msra.mxu0 %v256
    %1037 = vmatprep.subr.mxu0 0.0
    %1038 = vmatpush1.msra.mxu0 %v257
    %1039 = vmatprep.subr.mxu0 0.0
    %1040 = vmatpush1.msra.mxu0 0.0
    %1041 = vmatprep.subr.mxu0 0.0
    %1042 = vmatpush1.msra.mxu0 0.0
    %1043 = vmatprep.subr.mxu0 0.0
    %1044 = vmatpush1.msra.mxu0 0.0
    %1045 = vmatprep.subr.mxu0 0.0
    %1046 = vmatpush1.msra.mxu0 0.0
    %1047 = vmatprep.subr.mxu0 0.0
    %1048 = vmatpush1.msra.mxu0 0.0
    %1049 = vmatprep.subr.mxu0 0.0
    %1050 = vmatpush1.msra.mxu0 0.0
    %1051 = vmatprep.subr.mxu0 0.0
    %1052 = vmatpush1.msra.mxu0 0.0
    %1053 = vmatprep.subr.mxu0 0.0
    %1054 = vmatpush1.msra.mxu0 0.0
    %1055 = vmatprep.subr.mxu0 0.0
    %1056 = vmatpush1.msra.mxu0 0.0
    %1057 = vmatprep.subr.mxu0 0.0
    %1058 = vmatpush1.msra.mxu0 0.0
    %1059 = vmatprep.subr.mxu0 0.0
    %1060 = vmatpush1.msra.mxu0 0.0
    %1061 = vmatprep.subr.mxu0 0.0
    %1062 = vmatpush1.msra.mxu0 0.0
    %1063 = vmatprep.subr.mxu0 0.0
    %1064 = vmatpush1.msra.mxu0 0.0
    %1065 = vmatprep.subr.mxu0 0.0
    %1066 = vmatpush1.msra.mxu0 0.0
    %1067 = vmatprep.subr.mxu0 0.0
    %1068 = vmatpush1.msra.mxu0 0.0
    %1069 = vmatprep.subr.mxu0 0.0
    %1070 = vmatpush1.msra.mxu0 0.0
    %1071 = vmatprep.mubr.f32.mxu0 0.0
    %1072 = vmatmul.mubr.f32.gmra.mrb[0].mxu0 %v1004
    %v1073 = vpop.f32.mrb[0].mxu0
    %v1074 = vadd.f32 %v266, %v1073
    %v1075 = vpop.f32.mrb[0].mxu0
    %1076 = vdwg.mxu0
    %s1077 = scalar_lea.vmem [#allocation11], 40
    %1078 = vst [vmem:[%s1077] sm:$0xff] %v1074
    %s1079 = scalar_lea.vmem [#allocation2], 48
    %v1080 = vld [vmem:[%s1079] sm:$0xff]
    %1081 = vmatprep.subr.mxu0 0.0
    %1082 = vmatpush1.msra.mxu0 %v226
    %1083 = vmatprep.subr.mxu0 0.0
    %1084 = vmatpush1.msra.mxu0 %v227
    %1085 = vmatprep.subr.mxu0 0.0
    %1086 = vmatpush1.msra.mxu0 %v228
    %1087 = vmatprep.subr.mxu0 0.0
    %1088 = vmatpush1.msra.mxu0 %v229
    %1089 = vmatprep.subr.mxu0 0.0
    %1090 = vmatpush1.msra.mxu0 %v230
    %1091 = vmatprep.subr.mxu0 0.0
    %1092 = vmatpush1.msra.mxu0 %v231
    %1093 = vmatprep.subr.mxu0 0.0
    %1094 = vmatpush1.msra.mxu0 %v232
    %1095 = vmatprep.subr.mxu0 0.0
    %1096 = vmatpush1.msra.mxu0 %v233
    %1097 = vmatprep.subr.mxu0 0.0
    %1098 = vmatpush1.msra.mxu0 %v234
    %1099 = vmatprep.subr.mxu0 0.0
    %1100 = vmatpush1.msra.mxu0 %v235
    %1101 = vmatprep.subr.mxu0 0.0
    %1102 = vmatpush1.msra.mxu0 %v236
    %1103 = vmatprep.subr.mxu0 0.0
    %1104 = vmatpush1.msra.mxu0 %v237
    %1105 = vmatprep.subr.mxu0 0.0
    %1106 = vmatpush1.msra.mxu0 %v238
    %1107 = vmatprep.subr.mxu0 0.0
    %1108 = vmatpush1.msra.mxu0 %v239
    %1109 = vmatprep.subr.mxu0 0.0
    %1110 = vmatpush1.msra.mxu0 %v240
    %1111 = vmatprep.subr.mxu0 0.0
    %1112 = vmatpush1.msra.mxu0 %v241
    %1113 = vmatprep.subr.mxu0 0.0
    %1114 = vmatpush1.msra.mxu0 0.0
    %1115 = vmatprep.subr.mxu0 0.0
    %1116 = vmatpush1.msra.mxu0 0.0
    %1117 = vmatprep.subr.mxu0 0.0
    %1118 = vmatpush1.msra.mxu0 0.0
    %1119 = vmatprep.subr.mxu0 0.0
    %1120 = vmatpush1.msra.mxu0 0.0
    %1121 = vmatprep.subr.mxu0 0.0
    %1122 = vmatpush1.msra.mxu0 0.0
    %1123 = vmatprep.subr.mxu0 0.0
    %1124 = vmatpush1.msra.mxu0 0.0
    %1125 = vmatprep.subr.mxu0 0.0
    %1126 = vmatpush1.msra.mxu0 0.0
    %1127 = vmatprep.subr.mxu0 0.0
    %1128 = vmatpush1.msra.mxu0 0.0
    %1129 = vmatprep.subr.mxu0 0.0
    %1130 = vmatpush1.msra.mxu0 0.0
    %1131 = vmatprep.subr.mxu0 0.0
    %1132 = vmatpush1.msra.mxu0 0.0
    %1133 = vmatprep.subr.mxu0 0.0
    %1134 = vmatpush1.msra.mxu0 0.0
    %1135 = vmatprep.subr.mxu0 0.0
    %1136 = vmatpush1.msra.mxu0 0.0
    %1137 = vmatprep.subr.mxu0 0.0
    %1138 = vmatpush1.msra.mxu0 0.0
    %1139 = vmatprep.subr.mxu0 0.0
    %1140 = vmatpush1.msra.mxu0 0.0
    %1141 = vmatprep.subr.mxu0 0.0
    %1142 = vmatpush1.msra.mxu0 0.0
    %1143 = vmatprep.subr.mxu0 0.0
    %1144 = vmatpush1.msra.mxu0 0.0
    %1145 = vmatprep.mubr.f32.mxu0 0.0
    %1146 = vmatmul.mubr.f32.gmra.mrb[0].mxu0 %v1004
    %v1147 = vpop.f32.mrb[0].mxu0
    %v1148 = vadd.f32 0.0, %v1147
    %v1149 = vpop.f32.mrb[0].mxu0
    %1150 = vdwg.mxu0
    %v1151 = vadd.f32 %v1080, %v1148
    %v1152 = vtanh.pop %v1151
    %s1153 = scalar_lea.vmem [#allocation12], 48
    %1154 = vst [vmem:[%s1153] sm:$0xff] %v1152
    %1155 = vmatprep.subr.mxu0 0.0
    %1156 = vmatpush1.msra.mxu0 %v242
    %1157 = vmatprep.subr.mxu0 0.0
    %1158 = vmatpush1.msra.mxu0 %v243
    %1159 = vmatprep.subr.mxu0 0.0
    %1160 = vmatpush1.msra.mxu0 %v244
    %1161 = vmatprep.subr.mxu0 0.0
    %1162 = vmatpush1.msra.mxu0 %v245
    %1163 = vmatprep.subr.mxu0 0.0
    %1164 = vmatpush1.msra.mxu0 %v246
    %1165 = vmatprep.subr.mxu0 0.0
    %1166 = vmatpush1.msra.mxu0 %v247
    %1167 = vmatprep.subr.mxu0 0.0
    %1168 = vmatpush1.msra.mxu0 %v248
    %1169 = vmatprep.subr.mxu0 0.0
    %1170 = vmatpush1.msra.mxu0 %v249
    %1171 = vmatprep.subr.mxu0 0.0
    %1172 = vmatpush1.msra.mxu0 %v250
    %1173 = vmatprep.subr.mxu0 0.0
    %1174 = vmatpush1.msra.mxu0 %v251
    %1175 = vmatprep.subr.mxu0 0.0
    %1176 = vmatpush1.msra.mxu0 %v252
    %1177 = vmatprep.subr.mxu0 0.0
    %1178 = vmatpush1.msra.mxu0 %v253
    %1179 = vmatprep.subr.mxu0 0.0
    %1180 = vmatpush1.msra.mxu0 %v254
    %1181 = vmatprep.subr.mxu0 0.0
    %1182 = vmatpush1.msra.mxu0 %v255
    %1183 = vmatprep.subr.mxu0 0.0
    %1184 = vmatpush1.msra.mxu0 %v256
    %1185 = vmatprep.subr.mxu0 0.0
    %1186 = vmatpush1.msra.mxu0 %v257
    %1187 = vmatprep.subr.mxu0 0.0
    %1188 = vmatpush1.msra.mxu0 0.0
    %1189 = vmatprep.subr.mxu0 0.0
    %1190 = vmatpush1.msra.mxu0 0.0
    %1191 = vmatprep.subr.mxu0 0.0
    %1192 = vmatpush1.msra.mxu0 0.0
    %1193 = vmatprep.subr.mxu0 0.0
    %1194 = vmatpush1.msra.mxu0 0.0
    %1195 = vmatprep.subr.mxu0 0.0
    %1196 = vmatpush1.msra.mxu0 0.0
    %1197 = vmatprep.subr.mxu0 0.0
    %1198 = vmatpush1.msra.mxu0 0.0
    %1199 = vmatprep.subr.mxu0 0.0
    %1200 = vmatpush1.msra.mxu0 0.0
    %1201 = vmatprep.subr.mxu0 0.0
    %1202 = vmatpush1.msra.mxu0 0.0
    %1203 = vmatprep.subr.mxu0 0.0
    %1204 = vmatpush1.msra.mxu0 0.0
    %1205 = vmatprep.subr.mxu0 0.0
    %1206 = vmatpush1.msra.mxu0 0.0
    %1207 = vmatprep.subr.mxu0 0.0
    %1208 = vmatpush1.msra.mxu0 0.0
    %1209 = vmatprep.subr.mxu0 0.0
    %1210 = vmatpush1.msra.mxu0 0.0
    %1211 = vmatprep.subr.mxu0 0.0
    %1212 = vmatpush1.msra.mxu0 0.0
    %1213 = vmatprep.subr.mxu0 0.0
    %1214 = vmatpush1.msra.mxu0 0.0
    %1215 = vmatprep.subr.mxu0 0.0
    %1216 = vmatpush1.msra.mxu0 0.0
    %1217 = vmatprep.subr.mxu0 0.0
    %1218 = vmatpush1.msra.mxu0 0.0
    %1219 = vmatprep.mubr.f32.mxu0 0.0
    %1220 = vmatmul.mubr.f32.gmra.mrb[0].mxu0 %v1152
    %v1221 = vpop.f32.mrb[0].mxu0
    %v1222 = vadd.f32 %v266, %v1221
    %v1223 = vpop.f32.mrb[0].mxu0
    %1224 = vdwg.mxu0
    %s1225 = scalar_lea.vmem [#allocation11], 48
    %1226 = vst [vmem:[%s1225] sm:$0xff] %v1222
    %s1227 = scalar_lea.vmem [#allocation2], 56
    %v1228 = vld [vmem:[%s1227] sm:$0xff]
    %1229 = vmatprep.subr.mxu0 0.0
    %1230 = vmatpush1.msra.mxu0 %v226
    %1231 = vmatprep.subr.mxu0 0.0
    %1232 = vmatpush1.msra.mxu0 %v227
    %1233 = vmatprep.subr.mxu0 0.0
    %1234 = vmatpush1.msra.mxu0 %v228
    %1235 = vmatprep.subr.mxu0 0.0
    %1236 = vmatpush1.msra.mxu0 %v229
    %1237 = vmatprep.subr.mxu0 0.0
    %1238 = vmatpush1.msra.mxu0 %v230
    %1239 = vmatprep.subr.mxu0 0.0
    %1240 = vmatpush1.msra.mxu0 %v231
    %1241 = vmatprep.subr.mxu0 0.0
    %1242 = vmatpush1.msra.mxu0 %v232
    %1243 = vmatprep.subr.mxu0 0.0
    %1244 = vmatpush1.msra.mxu0 %v233
    %1245 = vmatprep.subr.mxu0 0.0
    %1246 = vmatpush1.msra.mxu0 %v234
    %1247 = vmatprep.subr.mxu0 0.0
    %1248 = vmatpush1.msra.mxu0 %v235
    %1249 = vmatprep.subr.mxu0 0.0
    %1250 = vmatpush1.msra.mxu0 %v236
    %1251 = vmatprep.subr.mxu0 0.0
    %1252 = vmatpush1.msra.mxu0 %v237
    %1253 = vmatprep.subr.mxu0 0.0
    %1254 = vmatpush1.msra.mxu0 %v238
    %1255 = vmatprep.subr.mxu0 0.0
    %1256 = vmatpush1.msra.mxu0 %v239
    %1257 = vmatprep.subr.mxu0 0.0
    %1258 = vmatpush1.msra.mxu0 %v240
    %1259 = vmatprep.subr.mxu0 0.0
    %1260 = vmatpush1.msra.mxu0 %v241
    %1261 = vmatprep.subr.mxu0 0.0
    %1262 = vmatpush1.msra.mxu0 0.0
    %1263 = vmatprep.subr.mxu0 0.0
    %1264 = vmatpush1.msra.mxu0 0.0
    %1265 = vmatprep.subr.mxu0 0.0
    %1266 = vmatpush1.msra.mxu0 0.0
    %1267 = vmatprep.subr.mxu0 0.0
    %1268 = vmatpush1.msra.mxu0 0.0
    %1269 = vmatprep.subr.mxu0 0.0
    %1270 = vmatpush1.msra.mxu0 0.0
    %1271 = vmatprep.subr.mxu0 0.0
    %1272 = vmatpush1.msra.mxu0 0.0
    %1273 = vmatprep.subr.mxu0 0.0
    %1274 = vmatpush1.msra.mxu0 0.0
    %1275 = vmatprep.subr.mxu0 0.0
    %1276 = vmatpush1.msra.mxu0 0.0
    %1277 = vmatprep.subr.mxu0 0.0
    %1278 = vmatpush1.msra.mxu0 0.0
    %1279 = vmatprep.subr.mxu0 0.0
    %1280 = vmatpush1.msra.mxu0 0.0
    %1281 = vmatprep.subr.mxu0 0.0
    %1282 = vmatpush1.msra.mxu0 0.0
    %1283 = vmatprep.subr.mxu0 0.0
    %1284 = vmatpush1.msra.mxu0 0.0
    %1285 = vmatprep.subr.mxu0 0.0
    %1286 = vmatpush1.msra.mxu0 0.0
    %1287 = vmatprep.subr.mxu0 0.0
    %1288 = vmatpush1.msra.mxu0 0.0
    %1289 = vmatprep.subr.mxu0 0.0
    %1290 = vmatpush1.msra.mxu0 0.0
    %1291 = vmatprep.subr.mxu0 0.0
    %1292 = vmatpush1.msra.mxu0 0.0
    %1293 = vmatprep.mubr.f32.mxu0 0.0
    %1294 = vmatmul.mubr.f32.gmra.mrb[0].mxu0 %v1152
    %v1295 = vpop.f32.mrb[0].mxu0
    %v1296 = vadd.f32 0.0, %v1295
    %v1297 = vpop.f32.mrb[0].mxu0
    %1298 = vdwg.mxu0
    %v1299 = vadd.f32 %v1228, %v1296
    %v1300 = vtanh.pop %v1299
    %s1301 = scalar_lea.vmem [#allocation12], 56
    %1302 = vst [vmem:[%s1301] sm:$0xff] %v1300
    %1303 = vmatprep.subr.mxu0 0.0
    %1304 = vmatpush1.msra.mxu0 %v242
    %1305 = vmatprep.subr.mxu0 0.0
    %1306 = vmatpush1.msra.mxu0 %v243
    %1307 = vmatprep.subr.mxu0 0.0
    %1308 = vmatpush1.msra.mxu0 %v244
    %1309 = vmatprep.subr.mxu0 0.0
    %1310 = vmatpush1.msra.mxu0 %v245
    %1311 = vmatprep.subr.mxu0 0.0
    %1312 = vmatpush1.msra.mxu0 %v246
    %1313 = vmatprep.subr.mxu0 0.0
    %1314 = vmatpush1.msra.mxu0 %v247
    %1315 = vmatprep.subr.mxu0 0.0
    %1316 = vmatpush1.msra.mxu0 %v248
    %1317 = vmatprep.subr.mxu0 0.0
    %1318 = vmatpush1.msra.mxu0 %v249
    %1319 = vmatprep.subr.mxu0 0.0
    %1320 = vmatpush1.msra.mxu0 %v250
    %1321 = vmatprep.subr.mxu0 0.0
    %1322 = vmatpush1.msra.mxu0 %v251
    %1323 = vmatprep.subr.mxu0 0.0
    %1324 = vmatpush1.msra.mxu0 %v252
    %1325 = vmatprep.subr.mxu0 0.0
    %1326 = vmatpush1.msra.mxu0 %v253
    %1327 = vmatprep.subr.mxu0 0.0
    %1328 = vmatpush1.msra.mxu0 %v254
    %1329 = vmatprep.subr.mxu0 0.0
    %1330 = vmatpush1.msra.mxu0 %v255
    %1331 = vmatprep.subr.mxu0 0.0
    %1332 = vmatpush1.msra.mxu0 %v256
    %1333 = vmatprep.subr.mxu0 0.0
    %1334 = vmatpush1.msra.mxu0 %v257
    %1335 = vmatprep.subr.mxu0 0.0
    %1336 = vmatpush1.msra.mxu0 0.0
    %1337 = vmatprep.subr.mxu0 0.0
    %1338 = vmatpush1.msra.mxu0 0.0
    %1339 = vmatprep.subr.mxu0 0.0
    %1340 = vmatpush1.msra.mxu0 0.0
    %1341 = vmatprep.subr.mxu0 0.0
    %1342 = vmatpush1.msra.mxu0 0.0
    %1343 = vmatprep.subr.mxu0 0.0
    %1344 = vmatpush1.msra.mxu0 0.0
    %1345 = vmatprep.subr.mxu0 0.0
    %1346 = vmatpush1.msra.mxu0 0.0
    %1347 = vmatprep.subr.mxu0 0.0
    %1348 = vmatpush1.msra.mxu0 0.0
    %1349 = vmatprep.subr.mxu0 0.0
    %1350 = vmatpush1.msra.mxu0 0.0
    %1351 = vmatprep.subr.mxu0 0.0
    %1352 = vmatpush1.msra.mxu0 0.0
    %1353 = vmatprep.subr.mxu0 0.0
    %1354 = vmatpush1.msra.mxu0 0.0
    %1355 = vmatprep.subr.mxu0 0.0
    %1356 = vmatpush1.msra.mxu0 0.0
    %1357 = vmatprep.subr.mxu0 0.0
    %1358 = vmatpush1.msra.mxu0 0.0
    %1359 = vmatprep.subr.mxu0 0.0
    %1360 = vmatpush1.msra.mxu0 0.0
    %1361 = vmatprep.subr.mxu0 0.0
    %1362 = vmatpush1.msra.mxu0 0.0
    %1363 = vmatprep.subr.mxu0 0.0
    %1364 = vmatpush1.msra.mxu0 0.0
    %1365 = vmatprep.subr.mxu0 0.0
    %1366 = vmatpush1.msra.mxu0 0.0
    %1367 = vmatprep.mubr.f32.mxu0 0.0
    %1368 = vmatmul.mubr.f32.gmra.mrb[0].mxu0 %v1300
    %v1369 = vpop.f32.mrb[0].mxu0
    %v1370 = vadd.f32 %v266, %v1369
    %v1371 = vpop.f32.mrb[0].mxu0
    %1372 = vdwg.mxu0
    %s1373 = scalar_lea.vmem [#allocation11], 56
    %1374 = vst [vmem:[%s1373] sm:$0xff] %v1370
    // Predicated region
    $region42: #{tpu_custom_call.1} parent=1 // pred_check
      _
    $region43: #{tpu_custom_call.1} parent=1 // pred_check_branch
      %1376 = sbr.rel (0) target = $region45
    $region44: #{tpu_custom_call.1} parent=1 // pred_region
      %s1378 = ssub.s32 1024, 1024
      %1379 = vsyncadd [#allocation5], %s1378
      %s1380 = sshll.u32 [#allocation11], 4
      %s1381 = int_to_ptr.vmem [resolvable:$true] %s1380
      %1386 = dma.vmem_to_hbm [thread:$0]  %s1381, 1024, %s6, [#allocation5], 128, 128, 8
    $region45: #{tpu_custom_call.1} parent=1 // pred_fallthru
      _
    // Predicated region
    $region46: #{tpu_custom_call.1} parent=1 // pred_check
      _
    $region47: #{tpu_custom_call.1} parent=1 // pred_check_branch
      %1388 = sbr.rel (0) target = $region49
    $region48: #{tpu_custom_call.1} parent=1 // pred_region
      %s1390 = ssub.s32 1024, 1024
      %1391 = vsyncadd [#allocation13], %s1390
      %s1392 = sshll.u32 [#allocation12], 4
      %s1393 = int_to_ptr.vmem [resolvable:$true] %s1392
      %1398 = dma.vmem_to_hbm [thread:$0]  %s1393, 1024, %s7, [#allocation13], 128, 128, 8
    $region49: #{tpu_custom_call.1} parent=1 // pred_fallthru
      _
    // Predicated region
    $region50: #{tpu_custom_call.1} parent=1 // pred_check
      _
    $region51: #{tpu_custom_call.1} parent=1 // pred_check_branch
      %1400 = sbr.rel (0) target = $region53
    $region52: #{tpu_custom_call.1} parent=1 // pred_region
      %1401 = dma.done [#allocation5], 1024
    $region53: #{tpu_custom_call.1} parent=1 // pred_fallthru
      _
    // Predicated region
    $region54: #{tpu_custom_call.1} parent=1 // pred_check
      _
    $region55: #{tpu_custom_call.1} parent=1 // pred_check_branch
      %1403 = sbr.rel (0) target = $region57
    $region56: #{tpu_custom_call.1} parent=1 // pred_region
      %1404 = dma.done [#allocation13], 1024
    $region57: #{tpu_custom_call.1} parent=1 // pred_fallthru
      _
    %1405 = vsyncpa [#allocation4], 1
    %1406 = vsyncpa [#allocation7], 1
    %1407 = vsyncpa [#allocation10], 1
    %1408 = vsyncpa [#allocation5], 1
    %1409 = vsyncpa [#allocation13], 1

</llo_original>
